<compile_context>
chip_gen: v7x
topology: tpu7x:2x2x1
jax: 0.10.0
libtpu: 0.0.40
codegen_flags: <defaults>
</compile_context>

<pallas_src>
import jax
import jax.numpy as jnp
from jax.experimental import pallas as pl
from jax.experimental.pallas import tpu as pltpu


def rnn_kernel(x_ref, h0_ref, wx_ref, wh_ref, b_in_ref, wout_ref, b_out_ref,
               out_ref, h_ref, hs_ref):
    """Whole RNN sequence in one kernel invocation.

    x_ref    : (T, B, IN)        full input, VMEM-resident
    h0_ref   : (B, H)            initial hidden state
    wx_ref   : (IN, H)           in2hidden weight, input part (pre-transposed)
    wh_ref   : (H, H)            in2hidden weight, recurrent part (pre-transposed)
    b_in_ref : (1, H)
    wout_ref : (H, OUT)          hidden2out weight (pre-transposed)
    b_out_ref: (1, OUT)
    out_ref  : (B, steps, OUT)   all step outputs, torch layout
    h_ref    : (B, H)            final hidden state, written once
    hs_ref   : (steps, B, H)     VMEM scratch holding per-step hidden states
    """
    B, steps, OUT = out_ref.shape
    IN = x_ref.shape[2]
    H = h_ref.shape[1]

    # ---- Hoisted input projection (off the serial critical path) -----------
    # One well-shaped (steps*B, IN) x (IN, H) matmul instead of `steps` tiny ones.
    x_slab = x_ref[0:steps]                                     # (steps, B, IN)
    xproj = (
        jnp.dot(x_slab.reshape(steps * B, IN), wx_ref[...],
                preferred_element_type=jnp.float32)
        + b_in_ref[...]
    ).reshape(steps, B, H)                                      # (steps, B, H)

    # ---- Serial recurrence ---------------------------------------------------
    # Only one small (B,H)x(H,H) matmul + tanh per dependent step. h lives in
    # vregs; each step's h goes to scratch via a static-index store (layout
    # matched, no relayout, no Python-list carry of projected outputs).
    w_h = wh_ref[...]
    h = h0_ref[...]
    for t in range(steps):  # static unroll; fine at steps <= ~16
        # TODO(synk): switch to lax.fori_loop with per-step stores if T grows.
        h = jnp.tanh(xproj[t]
                     + jnp.dot(h, w_h, preferred_element_type=jnp.float32))
        hs_ref[t] = h
    h_ref[...] = h

    # ---- Deferred output projection (off the critical path) ----------------
    # One (steps*B, H) x (H, OUT) matmul + bias, then per-step static-index
    # stores directly into the torch-layout out_ref (no jnp.stack relayout).
    proj = (
        jnp.dot(hs_ref[...].reshape(steps * B, H), wout_ref[...],
                preferred_element_type=jnp.float32)
        + b_out_ref[...]
    ).reshape(steps, B, OUT)
    for t in range(steps):
        out_ref[:, t:t + 1, :] = proj[t][:, None, :]            # (B, 1, OUT)


def prepare_params(params, input_size):
    """One-time layout prep (do this when params are created/loaded, NOT per call).

    Pre-transposes the Linear weights, splits in2hidden into input/recurrent
    parts (so the kernel never concatenates along the lane axis), and reshapes
    biases to 2-D rows.
    """
    H = params["w_in"].shape[0]          # torch Linear weight: (out, in)
    OUT = params["w_out"].shape[0]
    w_in_t = jnp.transpose(params["w_in"])              # (IN+H, H)
    return {
        "w_x": w_in_t[:input_size],                     # (IN, H)
        "w_h": w_in_t[input_size:],                     # (H, H)
        "b_in": params["b_in"].reshape(1, H),           # (1, H)
        "w_out_t": jnp.transpose(params["w_out"]),      # (H, OUT)
        "b_out": params["b_out"].reshape(1, OUT),       # (1, OUT)
    }


def ex_rnn_forward(x, hidden_state, prepped):
    """Pallas implementation of ExRNN.forward(x, hidden_state).

    `prepped` must come from prepare_params (layout glue is not done here so
    the forward pass is a single pallas_call).
    """
    T, B, IN = x.shape
    steps = x.shape[1]                   # matches `range(x.size(1))`
    # Pallas does not bounds-check VMEM reads; this assert guards x_ref[0:steps].
    assert T >= steps, "reference slices x[t] along axis 0 for t < x.shape[1]"
    H = hidden_state.shape[1]
    OUT = prepped["w_out_t"].shape[1]

    vmem = lambda: pl.BlockSpec(memory_space=pltpu.MemorySpace.VMEM)

    outputs, h_final = pl.pallas_call(
        rnn_kernel,
        out_shape=(jax.ShapeDtypeStruct((B, steps, OUT), jnp.float32),
                   jax.ShapeDtypeStruct((B, H), jnp.float32)),
        in_specs=[vmem() for _ in range(7)],
        out_specs=(vmem(), vmem()),
        scratch_shapes=[pltpu.VMEM((steps, B, H), jnp.float32)],
    )(x, hidden_state, prepped["w_x"], prepped["w_h"], prepped["b_in"],
      prepped["w_out_t"], prepped["b_out"])

    # Output already laid out as (B, steps, OUT); no wrapper transpose needed.
    return outputs, h_final


def ex_rnn_reference(x, hidden_state, params):
    """Pure-JAX line-by-line transcription of the PyTorch forward."""
    w_in, b_in = params["w_in"], params["b_in"]
    w_out, b_out = params["w_out"], params["b_out"]
    h = hidden_state
    outs = []
    for t in range(x.shape[1]):
        combined = jnp.concatenate([x[t, :], h], axis=1)
        h = jnp.tanh(combined @ w_in.T + b_in)
        out = h @ w_out.T + b_out
        outs.append(out[:, None, :])
    return jnp.concatenate(outs, axis=1), h


def init_params(key, input_size, hidden_size, output_size):
    """Deterministic init mimicking torch.nn.Linear default (uniform ±1/sqrt(fan_in))."""
    k1, k2, k3, k4 = jax.random.split(key, 4)
    fan_in1 = input_size + hidden_size
    fan_in2 = hidden_size
    b1 = 1.0 / jnp.sqrt(fan_in1)
    b2 = 1.0 / jnp.sqrt(fan_in2)
    return {
        "w_in": jax.random.uniform(k1, (hidden_size, fan_in1), jnp.float32, -b1, b1),
        "b_in": jax.random.uniform(k2, (hidden_size,), jnp.float32, -b1, b1),
        "w_out": jax.random.uniform(k3, (output_size, fan_in2), jnp.float32, -b2, b2),
        "b_out": jax.random.uniform(k4, (output_size,), jnp.float32, -b2, b2),
    }


if __name__ == "__main__":
    input_size, hidden_size, output_size = 16, 32, 8
    B = 8          # batch
    T = 8          # time (== number of steps == x.shape[1], see layout comment)

    key = jax.random.PRNGKey(0)
    kx, kp = jax.random.split(key)
    x = jax.random.normal(kx, (T, B, input_size), jnp.float32)
    hidden0 = jnp.zeros((B, hidden_size), jnp.float32)   # init_hidden(bs)
    params = init_params(kp, input_size, hidden_size, output_size)

    # One-time layout prep outside the hot path (review item: no per-call glue).
    prepped = jax.tree_util.tree_map(jax.block_until_ready,
                                     prepare_params(params, input_size))

    fwd = jax.jit(ex_rnn_forward)
    outputs, h_final = fwd(x, hidden0, prepped)
    outputs = jax.block_until_ready(outputs)
    h_final = jax.block_until_ready(h_final)

    ref_out, ref_h = ex_rnn_reference(x, hidden0, params)
    assert outputs.shape == (B, T, output_size)
    assert h_final.shape == (B, hidden_size)
    assert jnp.allclose(outputs, ref_out, atol=1e-5, rtol=1e-5)
    assert jnp.allclose(h_final, ref_h, atol=1e-5, rtol=1e-5)

    print("KERNEL_OK")
</pallas_src>

<mosaic_0001>
module attributes {stable_mosaic.version = 11 : i64} {
  func.func @rnn_kernel(%arg0: memref<8x8x16xf32, #tpu.memory_space<vmem>>, %arg1: memref<8x32xf32, #tpu.memory_space<vmem>>, %arg2: memref<16x32xf32, #tpu.memory_space<vmem>>, %arg3: memref<32x32xf32, #tpu.memory_space<vmem>>, %arg4: memref<1x32xf32, #tpu.memory_space<vmem>>, %arg5: memref<32x8xf32, #tpu.memory_space<vmem>>, %arg6: memref<1x8xf32, #tpu.memory_space<vmem>>, %arg7: memref<8x8x8xf32, #tpu.memory_space<vmem>>, %arg8: memref<8x32xf32, #tpu.memory_space<vmem>>, %arg9: memref<8x8x32xf32, #tpu.memory_space<vmem>>) attributes {dimension_semantics = [], scalar_prefetch = 0 : i64, scratch_operands = 1 : i64, tpu.core_type = #tpu.core_type<tc>} {
    %c0 = arith.constant 0 : index
    %c0_0 = arith.constant 0 : index
    %c0_1 = arith.constant 0 : index
    %0 = vector.load %arg0[%c0, %c0_0, %c0_1] : memref<8x8x16xf32, #tpu.memory_space<vmem>>, vector<8x8x16xf32>
    %1 = vector.shape_cast %0 : vector<8x8x16xf32> to vector<64x16xf32>
    %c0_2 = arith.constant 0 : index
    %c0_3 = arith.constant 0 : index
    %2 = vector.load %arg2[%c0_2, %c0_3] : memref<16x32xf32, #tpu.memory_space<vmem>>, vector<16x32xf32>
    %cst = arith.constant dense<0.000000e+00> : vector<64x32xf32>
    %3 = tpu.matmul %1, %2, %cst {dimension_numbers = #tpu.dot_dimension_numbers<[1], [0], [0], [1], [0, 0, 1, 1], [], []>} : vector<64x16xf32>, vector<16x32xf32>, vector<64x32xf32> -> vector<64x32xf32>
    %c0_4 = arith.constant 0 : index
    %c0_5 = arith.constant 0 : index
    %4 = vector.load %arg4[%c0_4, %c0_5] : memref<1x32xf32, #tpu.memory_space<vmem>>, vector<1x32xf32>
    %5 = vector.broadcast %4 : vector<1x32xf32> to vector<64x32xf32>
    %6 = arith.addf %3, %5 : vector<64x32xf32>
    %7 = vector.shape_cast %6 : vector<64x32xf32> to vector<8x8x32xf32>
    %c0_6 = arith.constant 0 : index
    %c0_7 = arith.constant 0 : index
    %8 = vector.load %arg3[%c0_6, %c0_7] : memref<32x32xf32, #tpu.memory_space<vmem>>, vector<32x32xf32>
    %c0_8 = arith.constant 0 : index
    %c0_9 = arith.constant 0 : index
    %9 = vector.load %arg1[%c0_8, %c0_9] : memref<8x32xf32, #tpu.memory_space<vmem>>, vector<8x32xf32>
    %10 = vector.extract_strided_slice %7 {offsets = [0, 0, 0], sizes = [1, 8, 32], strides = [1, 1, 1]} : vector<8x8x32xf32> to vector<1x8x32xf32>
    %11 = vector.shape_cast %10 : vector<1x8x32xf32> to vector<8x32xf32>
    %cst_10 = arith.constant dense<0.000000e+00> : vector<8x32xf32>
    %12 = tpu.matmul %9, %8, %cst_10 {dimension_numbers = #tpu.dot_dimension_numbers<[1], [0], [0], [1], [0, 0, 1, 1], [], []>} : vector<8x32xf32>, vector<32x32xf32>, vector<8x32xf32> -> vector<8x32xf32>
    %13 = arith.addf %11, %12 : vector<8x32xf32>
    %14 = math.tanh %13 : vector<8x32xf32>
    %c0_11 = arith.constant 0 : index
    %c0_12 = arith.constant 0 : index
    %c0_13 = arith.constant 0 : index
    %15 = vector.load %arg9[%c0_11, %c0_12, %c0_13] : memref<8x8x32xf32, #tpu.memory_space<vmem>>, vector<1x8x32xf32>
    %16 = vector.shape_cast %15 : vector<1x8x32xf32> to vector<8x32xf32>
    %17 = vector.shape_cast %14 : vector<8x32xf32> to vector<1x8x32xf32>
    tpu.vector_store %arg9[%c0_11, %c0_12, %c0_13], %17 {strides = array<i32>} : memref<8x8x32xf32, #tpu.memory_space<vmem>>, vector<1x8x32xf32>,
    %18 = vector.extract_strided_slice %7 {offsets = [1, 0, 0], sizes = [1, 8, 32], strides = [1, 1, 1]} : vector<8x8x32xf32> to vector<1x8x32xf32>
    %19 = vector.shape_cast %18 : vector<1x8x32xf32> to vector<8x32xf32>
    %cst_14 = arith.constant dense<0.000000e+00> : vector<8x32xf32>
    %20 = tpu.matmul %14, %8, %cst_14 {dimension_numbers = #tpu.dot_dimension_numbers<[1], [0], [0], [1], [0, 0, 1, 1], [], []>} : vector<8x32xf32>, vector<32x32xf32>, vector<8x32xf32> -> vector<8x32xf32>
    %21 = arith.addf %19, %20 : vector<8x32xf32>
    %22 = math.tanh %21 : vector<8x32xf32>
    %c1 = arith.constant 1 : index
    %c0_15 = arith.constant 0 : index
    %c0_16 = arith.constant 0 : index
    %23 = vector.load %arg9[%c1, %c0_15, %c0_16] : memref<8x8x32xf32, #tpu.memory_space<vmem>>, vector<1x8x32xf32>
    %24 = vector.shape_cast %23 : vector<1x8x32xf32> to vector<8x32xf32>
    %25 = vector.shape_cast %22 : vector<8x32xf32> to vector<1x8x32xf32>
    tpu.vector_store %arg9[%c1, %c0_15, %c0_16], %25 {strides = array<i32>} : memref<8x8x32xf32, #tpu.memory_space<vmem>>, vector<1x8x32xf32>,
    %26 = vector.extract_strided_slice %7 {offsets = [2, 0, 0], sizes = [1, 8, 32], strides = [1, 1, 1]} : vector<8x8x32xf32> to vector<1x8x32xf32>
    %27 = vector.shape_cast %26 : vector<1x8x32xf32> to vector<8x32xf32>
    %cst_17 = arith.constant dense<0.000000e+00> : vector<8x32xf32>
    %28 = tpu.matmul %22, %8, %cst_17 {dimension_numbers = #tpu.dot_dimension_numbers<[1], [0], [0], [1], [0, 0, 1, 1], [], []>} : vector<8x32xf32>, vector<32x32xf32>, vector<8x32xf32> -> vector<8x32xf32>
    %29 = arith.addf %27, %28 : vector<8x32xf32>
    %30 = math.tanh %29 : vector<8x32xf32>
    %c2 = arith.constant 2 : index
    %c0_18 = arith.constant 0 : index
    %c0_19 = arith.constant 0 : index
    %31 = vector.load %arg9[%c2, %c0_18, %c0_19] : memref<8x8x32xf32, #tpu.memory_space<vmem>>, vector<1x8x32xf32>
    %32 = vector.shape_cast %31 : vector<1x8x32xf32> to vector<8x32xf32>
    %33 = vector.shape_cast %30 : vector<8x32xf32> to vector<1x8x32xf32>
    tpu.vector_store %arg9[%c2, %c0_18, %c0_19], %33 {strides = array<i32>} : memref<8x8x32xf32, #tpu.memory_space<vmem>>, vector<1x8x32xf32>,
    %34 = vector.extract_strided_slice %7 {offsets = [3, 0, 0], sizes = [1, 8, 32], strides = [1, 1, 1]} : vector<8x8x32xf32> to vector<1x8x32xf32>
    %35 = vector.shape_cast %34 : vector<1x8x32xf32> to vector<8x32xf32>
    %cst_20 = arith.constant dense<0.000000e+00> : vector<8x32xf32>
    %36 = tpu.matmul %30, %8, %cst_20 {dimension_numbers = #tpu.dot_dimension_numbers<[1], [0], [0], [1], [0, 0, 1, 1], [], []>} : vector<8x32xf32>, vector<32x32xf32>, vector<8x32xf32> -> vector<8x32xf32>
    %37 = arith.addf %35, %36 : vector<8x32xf32>
    %38 = math.tanh %37 : vector<8x32xf32>
    %c3 = arith.constant 3 : index
    %c0_21 = arith.constant 0 : index
    %c0_22 = arith.constant 0 : index
    %39 = vector.load %arg9[%c3, %c0_21, %c0_22] : memref<8x8x32xf32, #tpu.memory_space<vmem>>, vector<1x8x32xf32>
    %40 = vector.shape_cast %39 : vector<1x8x32xf32> to vector<8x32xf32>
    %41 = vector.shape_cast %38 : vector<8x32xf32> to vector<1x8x32xf32>
    tpu.vector_store %arg9[%c3, %c0_21, %c0_22], %41 {strides = array<i32>} : memref<8x8x32xf32, #tpu.memory_space<vmem>>, vector<1x8x32xf32>,
    %42 = vector.extract_strided_slice %7 {offsets = [4, 0, 0], sizes = [1, 8, 32], strides = [1, 1, 1]} : vector<8x8x32xf32> to vector<1x8x32xf32>
    %43 = vector.shape_cast %42 : vector<1x8x32xf32> to vector<8x32xf32>
    %cst_23 = arith.constant dense<0.000000e+00> : vector<8x32xf32>
    %44 = tpu.matmul %38, %8, %cst_23 {dimension_numbers = #tpu.dot_dimension_numbers<[1], [0], [0], [1], [0, 0, 1, 1], [], []>} : vector<8x32xf32>, vector<32x32xf32>, vector<8x32xf32> -> vector<8x32xf32>
    %45 = arith.addf %43, %44 : vector<8x32xf32>
    %46 = math.tanh %45 : vector<8x32xf32>
    %c4 = arith.constant 4 : index
    %c0_24 = arith.constant 0 : index
    %c0_25 = arith.constant 0 : index
    %47 = vector.load %arg9[%c4, %c0_24, %c0_25] : memref<8x8x32xf32, #tpu.memory_space<vmem>>, vector<1x8x32xf32>
    %48 = vector.shape_cast %47 : vector<1x8x32xf32> to vector<8x32xf32>
    %49 = vector.shape_cast %46 : vector<8x32xf32> to vector<1x8x32xf32>
    tpu.vector_store %arg9[%c4, %c0_24, %c0_25], %49 {strides = array<i32>} : memref<8x8x32xf32, #tpu.memory_space<vmem>>, vector<1x8x32xf32>,
    %50 = vector.extract_strided_slice %7 {offsets = [5, 0, 0], sizes = [1, 8, 32], strides = [1, 1, 1]} : vector<8x8x32xf32> to vector<1x8x32xf32>
    %51 = vector.shape_cast %50 : vector<1x8x32xf32> to vector<8x32xf32>
    %cst_26 = arith.constant dense<0.000000e+00> : vector<8x32xf32>
    %52 = tpu.matmul %46, %8, %cst_26 {dimension_numbers = #tpu.dot_dimension_numbers<[1], [0], [0], [1], [0, 0, 1, 1], [], []>} : vector<8x32xf32>, vector<32x32xf32>, vector<8x32xf32> -> vector<8x32xf32>
    %53 = arith.addf %51, %52 : vector<8x32xf32>
    %54 = math.tanh %53 : vector<8x32xf32>
    %c5 = arith.constant 5 : index
    %c0_27 = arith.constant 0 : index
    %c0_28 = arith.constant 0 : index
    %55 = vector.load %arg9[%c5, %c0_27, %c0_28] : memref<8x8x32xf32, #tpu.memory_space<vmem>>, vector<1x8x32xf32>
    %56 = vector.shape_cast %55 : vector<1x8x32xf32> to vector<8x32xf32>
    %57 = vector.shape_cast %54 : vector<8x32xf32> to vector<1x8x32xf32>
    tpu.vector_store %arg9[%c5, %c0_27, %c0_28], %57 {strides = array<i32>} : memref<8x8x32xf32, #tpu.memory_space<vmem>>, vector<1x8x32xf32>,
    %58 = vector.extract_strided_slice %7 {offsets = [6, 0, 0], sizes = [1, 8, 32], strides = [1, 1, 1]} : vector<8x8x32xf32> to vector<1x8x32xf32>
    %59 = vector.shape_cast %58 : vector<1x8x32xf32> to vector<8x32xf32>
    %cst_29 = arith.constant dense<0.000000e+00> : vector<8x32xf32>
    %60 = tpu.matmul %54, %8, %cst_29 {dimension_numbers = #tpu.dot_dimension_numbers<[1], [0], [0], [1], [0, 0, 1, 1], [], []>} : vector<8x32xf32>, vector<32x32xf32>, vector<8x32xf32> -> vector<8x32xf32>
    %61 = arith.addf %59, %60 : vector<8x32xf32>
    %62 = math.tanh %61 : vector<8x32xf32>
    %c6 = arith.constant 6 : index
    %c0_30 = arith.constant 0 : index
    %c0_31 = arith.constant 0 : index
    %63 = vector.load %arg9[%c6, %c0_30, %c0_31] : memref<8x8x32xf32, #tpu.memory_space<vmem>>, vector<1x8x32xf32>
    %64 = vector.shape_cast %63 : vector<1x8x32xf32> to vector<8x32xf32>
    %65 = vector.shape_cast %62 : vector<8x32xf32> to vector<1x8x32xf32>
    tpu.vector_store %arg9[%c6, %c0_30, %c0_31], %65 {strides = array<i32>} : memref<8x8x32xf32, #tpu.memory_space<vmem>>, vector<1x8x32xf32>,
    %66 = vector.extract_strided_slice %7 {offsets = [7, 0, 0], sizes = [1, 8, 32], strides = [1, 1, 1]} : vector<8x8x32xf32> to vector<1x8x32xf32>
    %67 = vector.shape_cast %66 : vector<1x8x32xf32> to vector<8x32xf32>
    %cst_32 = arith.constant dense<0.000000e+00> : vector<8x32xf32>
    %68 = tpu.matmul %62, %8, %cst_32 {dimension_numbers = #tpu.dot_dimension_numbers<[1], [0], [0], [1], [0, 0, 1, 1], [], []>} : vector<8x32xf32>, vector<32x32xf32>, vector<8x32xf32> -> vector<8x32xf32>
    %69 = arith.addf %67, %68 : vector<8x32xf32>
    %70 = math.tanh %69 : vector<8x32xf32>
    %c7 = arith.constant 7 : index
    %c0_33 = arith.constant 0 : index
    %c0_34 = arith.constant 0 : index
    %71 = vector.load %arg9[%c7, %c0_33, %c0_34] : memref<8x8x32xf32, #tpu.memory_space<vmem>>, vector<1x8x32xf32>
    %72 = vector.shape_cast %71 : vector<1x8x32xf32> to vector<8x32xf32>
    %73 = vector.shape_cast %70 : vector<8x32xf32> to vector<1x8x32xf32>
    tpu.vector_store %arg9[%c7, %c0_33, %c0_34], %73 {strides = array<i32>} : memref<8x8x32xf32, #tpu.memory_space<vmem>>, vector<1x8x32xf32>,
    %c0_35 = arith.constant 0 : index
    %c0_36 = arith.constant 0 : index
    %74 = vector.load %arg8[%c0_35, %c0_36] : memref<8x32xf32, #tpu.memory_space<vmem>>, vector<8x32xf32>
    tpu.vector_store %arg8[%c0_35, %c0_36], %70 {strides = array<i32>} : memref<8x32xf32, #tpu.memory_space<vmem>>, vector<8x32xf32>,
    %c0_37 = arith.constant 0 : index
    %c0_38 = arith.constant 0 : index
    %c0_39 = arith.constant 0 : index
    %75 = vector.load %arg9[%c0_37, %c0_38, %c0_39] : memref<8x8x32xf32, #tpu.memory_space<vmem>>, vector<8x8x32xf32>
    %76 = vector.shape_cast %75 : vector<8x8x32xf32> to vector<64x32xf32>
    %c0_40 = arith.constant 0 : index
    %c0_41 = arith.constant 0 : index
    %77 = vector.load %arg5[%c0_40, %c0_41] : memref<32x8xf32, #tpu.memory_space<vmem>>, vector<32x8xf32>
    %cst_42 = arith.constant dense<0.000000e+00> : vector<64x8xf32>
    %78 = tpu.matmul %76, %77, %cst_42 {dimension_numbers = #tpu.dot_dimension_numbers<[1], [0], [0], [1], [0, 0, 1, 1], [], []>} : vector<64x32xf32>, vector<32x8xf32>, vector<64x8xf32> -> vector<64x8xf32>
    %c0_43 = arith.constant 0 : index
    %c0_44 = arith.constant 0 : index
    %79 = vector.load %arg6[%c0_43, %c0_44] : memref<1x8xf32, #tpu.memory_space<vmem>>, vector<1x8xf32>
    %80 = vector.broadcast %79 : vector<1x8xf32> to vector<64x8xf32>
    %81 = arith.addf %78, %80 : vector<64x8xf32>
    %82 = vector.shape_cast %81 : vector<64x8xf32> to vector<8x8x8xf32>
    %83 = vector.extract_strided_slice %82 {offsets = [0, 0, 0], sizes = [1, 8, 8], strides = [1, 1, 1]} : vector<8x8x8xf32> to vector<1x8x8xf32>
    %84 = vector.shape_cast %83 : vector<1x8x8xf32> to vector<8x8xf32>
    %85 = vector.shape_cast %84 : vector<8x8xf32> to vector<8x1x8xf32>
    %c0_45 = arith.constant 0 : index
    %c0_46 = arith.constant 0 : index
    %c0_47 = arith.constant 0 : index
    %86 = vector.load %arg7[%c0_45, %c0_46, %c0_47] : memref<8x8x8xf32, #tpu.memory_space<vmem>>, vector<8x1x8xf32>
    tpu.vector_store %arg7[%c0_45, %c0_46, %c0_47], %85 {strides = array<i32>} : memref<8x8x8xf32, #tpu.memory_space<vmem>>, vector<8x1x8xf32>,
    %87 = vector.extract_strided_slice %82 {offsets = [1, 0, 0], sizes = [1, 8, 8], strides = [1, 1, 1]} : vector<8x8x8xf32> to vector<1x8x8xf32>
    %88 = vector.shape_cast %87 : vector<1x8x8xf32> to vector<8x8xf32>
    %89 = vector.shape_cast %88 : vector<8x8xf32> to vector<8x1x8xf32>
    %c0_48 = arith.constant 0 : index
    %c1_49 = arith.constant 1 : index
    %c0_50 = arith.constant 0 : index
    %90 = vector.load %arg7[%c0_48, %c1_49, %c0_50] : memref<8x8x8xf32, #tpu.memory_space<vmem>>, vector<8x1x8xf32>
    tpu.vector_store %arg7[%c0_48, %c1_49, %c0_50], %89 {strides = array<i32>} : memref<8x8x8xf32, #tpu.memory_space<vmem>>, vector<8x1x8xf32>,
    %91 = vector.extract_strided_slice %82 {offsets = [2, 0, 0], sizes = [1, 8, 8], strides = [1, 1, 1]} : vector<8x8x8xf32> to vector<1x8x8xf32>
    %92 = vector.shape_cast %91 : vector<1x8x8xf32> to vector<8x8xf32>
    %93 = vector.shape_cast %92 : vector<8x8xf32> to vector<8x1x8xf32>
    %c0_51 = arith.constant 0 : index
    %c2_52 = arith.constant 2 : index
    %c0_53 = arith.constant 0 : index
    %94 = vector.load %arg7[%c0_51, %c2_52, %c0_53] : memref<8x8x8xf32, #tpu.memory_space<vmem>>, vector<8x1x8xf32>
    tpu.vector_store %arg7[%c0_51, %c2_52, %c0_53], %93 {strides = array<i32>} : memref<8x8x8xf32, #tpu.memory_space<vmem>>, vector<8x1x8xf32>,
    %95 = vector.extract_strided_slice %82 {offsets = [3, 0, 0], sizes = [1, 8, 8], strides = [1, 1, 1]} : vector<8x8x8xf32> to vector<1x8x8xf32>
    %96 = vector.shape_cast %95 : vector<1x8x8xf32> to vector<8x8xf32>
    %97 = vector.shape_cast %96 : vector<8x8xf32> to vector<8x1x8xf32>
    %c0_54 = arith.constant 0 : index
    %c3_55 = arith.constant 3 : index
    %c0_56 = arith.constant 0 : index
    %98 = vector.load %arg7[%c0_54, %c3_55, %c0_56] : memref<8x8x8xf32, #tpu.memory_space<vmem>>, vector<8x1x8xf32>
    tpu.vector_store %arg7[%c0_54, %c3_55, %c0_56], %97 {strides = array<i32>} : memref<8x8x8xf32, #tpu.memory_space<vmem>>, vector<8x1x8xf32>,
    %99 = vector.extract_strided_slice %82 {offsets = [4, 0, 0], sizes = [1, 8, 8], strides = [1, 1, 1]} : vector<8x8x8xf32> to vector<1x8x8xf32>
    %100 = vector.shape_cast %99 : vector<1x8x8xf32> to vector<8x8xf32>
    %101 = vector.shape_cast %100 : vector<8x8xf32> to vector<8x1x8xf32>
    %c0_57 = arith.constant 0 : index
    %c4_58 = arith.constant 4 : index
    %c0_59 = arith.constant 0 : index
    %102 = vector.load %arg7[%c0_57, %c4_58, %c0_59] : memref<8x8x8xf32, #tpu.memory_space<vmem>>, vector<8x1x8xf32>
    tpu.vector_store %arg7[%c0_57, %c4_58, %c0_59], %101 {strides = array<i32>} : memref<8x8x8xf32, #tpu.memory_space<vmem>>, vector<8x1x8xf32>,
    %103 = vector.extract_strided_slice %82 {offsets = [5, 0, 0], sizes = [1, 8, 8], strides = [1, 1, 1]} : vector<8x8x8xf32> to vector<1x8x8xf32>
    %104 = vector.shape_cast %103 : vector<1x8x8xf32> to vector<8x8xf32>
    %105 = vector.shape_cast %104 : vector<8x8xf32> to vector<8x1x8xf32>
    %c0_60 = arith.constant 0 : index
    %c5_61 = arith.constant 5 : index
    %c0_62 = arith.constant 0 : index
    %106 = vector.load %arg7[%c0_60, %c5_61, %c0_62] : memref<8x8x8xf32, #tpu.memory_space<vmem>>, vector<8x1x8xf32>
    tpu.vector_store %arg7[%c0_60, %c5_61, %c0_62], %105 {strides = array<i32>} : memref<8x8x8xf32, #tpu.memory_space<vmem>>, vector<8x1x8xf32>,
    %107 = vector.extract_strided_slice %82 {offsets = [6, 0, 0], sizes = [1, 8, 8], strides = [1, 1, 1]} : vector<8x8x8xf32> to vector<1x8x8xf32>
    %108 = vector.shape_cast %107 : vector<1x8x8xf32> to vector<8x8xf32>
    %109 = vector.shape_cast %108 : vector<8x8xf32> to vector<8x1x8xf32>
    %c0_63 = arith.constant 0 : index
    %c6_64 = arith.constant 6 : index
    %c0_65 = arith.constant 0 : index
    %110 = vector.load %arg7[%c0_63, %c6_64, %c0_65] : memref<8x8x8xf32, #tpu.memory_space<vmem>>, vector<8x1x8xf32>
    tpu.vector_store %arg7[%c0_63, %c6_64, %c0_65], %109 {strides = array<i32>} : memref<8x8x8xf32, #tpu.memory_space<vmem>>, vector<8x1x8xf32>,
    %111 = vector.extract_strided_slice %82 {offsets = [7, 0, 0], sizes = [1, 8, 8], strides = [1, 1, 1]} : vector<8x8x8xf32> to vector<1x8x8xf32>
    %112 = vector.shape_cast %111 : vector<1x8x8xf32> to vector<8x8xf32>
    %113 = vector.shape_cast %112 : vector<8x8xf32> to vector<8x1x8xf32>
    %c0_66 = arith.constant 0 : index
    %c7_67 = arith.constant 7 : index
    %c0_68 = arith.constant 0 : index
    %114 = vector.load %arg7[%c0_66, %c7_67, %c0_68] : memref<8x8x8xf32, #tpu.memory_space<vmem>>, vector<8x1x8xf32>
    tpu.vector_store %arg7[%c0_66, %c7_67, %c0_68], %113 {strides = array<i32>} : memref<8x8x8xf32, #tpu.memory_space<vmem>>, vector<8x1x8xf32>,
    return
  }
}

</mosaic_0001>

<llo_original>
// kernel: ex_rnn_forward.1
$region0: #{ex_rnn_forward.1}
  #allocation0 [shape = 'u32[]', space=smem, size = 0x4, offset = 0x4, fixed_abs, tag = 'smem constant byte address 0x4 - core index']
  #allocation1 [shape = 'u32[144,128]{1,0:T(1,128)}', space=vmem, size = 0x12000, scoped, tag = 'internal scratch']
  #allocation2 [shape = 'f32[8,8,32]{2,1,0:T(8,128)}', space=vmem, size = 0x8000, scoped, tag = 'scratch operand']
  %s0 = inlined_call_operand.hbm [shape: f32[8,8,16], index: 0, kind: input, shape index: {}]
  %s1 = inlined_call_operand.hbm [shape: f32[8,32], index: 1, kind: input, shape index: {}]
  %s2 = inlined_call_operand.vmem [shape: f32[16,32], index: 2, kind: input, shape index: {}]
  %s3 = inlined_call_operand.vmem [shape: f32[32,32], index: 3, kind: input, shape index: {}]
  %s4 = inlined_call_operand.vmem [shape: f32[1,32], index: 4, kind: input, shape index: {}]
  %s5 = inlined_call_operand.vmem [shape: f32[32,8], index: 5, kind: input, shape index: {}]
  %s6 = inlined_call_operand.vmem [shape: f32[1,8], index: 6, kind: input, shape index: {}]
  %s7 = inlined_call_operand.hbm [shape: f32[8,8,8], index: 7, kind: output, shape index: {0}]
  %s8 = inlined_call_operand.hbm [shape: f32[8,32], index: 8, kind: output, shape index: {1}]
  %9 = xla_tuple %s7, %s8
  %s10 = sld [smem:[#allocation0]]
  $region54: #{ex_rnn_forward.1} parent=0
    _
  %s12 = ssub.s32 1, %s10
  %s13 = scalar_select 0, %s12, %s10
  $region1: #{ex_rnn_forward.1} parent=0
    #allocation3 [shape = 'u8[32768]{0}', space=vmem, size = 0x8000, scoped, tag = 'input window, operand 0, single buffered']
    #allocation4 [shape = 's32[1]{0}', space=sflag, size = 0x4, scoped, tag = 'scoped memory for ex_rnn_forward.1']
    #allocation5 [shape = 's32[1]{0}', space=sflag, size = 0x4, scoped, tag = 'scoped memory for ex_rnn_forward.1']
    #allocation6 [shape = 'u8[4096]{0}', space=vmem, size = 0x1000, scoped, tag = 'input window, operand 1, single buffered']
    #allocation7 [shape = 's32[1]{0}', space=sflag, size = 0x4, scoped, tag = 'scoped memory for ex_rnn_forward.1']
    #allocation8 [shape = 'u8[32768]{0}', space=vmem, size = 0x8000, scoped, tag = 'output window, operand 0, single buffered']
    #allocation9 [shape = 'u8[4096]{0}', space=vmem, size = 0x1000, scoped, tag = 'output window, operand 1, single buffered']
    #allocation10 [shape = 's32[1]{0}', space=sflag, size = 0x4, scoped, tag = 'scoped memory for ex_rnn_forward.1']
    %14 = vsyncpa [#allocation4], 0
    %15 = vsyncpa [#allocation7], 0
    %16 = vsyncpa [#allocation5], 0
    %17 = vsyncpa [#allocation10], 0
    // Predicated region
    $region2: #{ex_rnn_forward.1} parent=1 // pred_check
      _
    $region3: #{ex_rnn_forward.1} parent=1 // pred_check_branch
      %19 = sbr.rel (0) target = $region5
    $region4: #{ex_rnn_forward.1} parent=1 // pred_region
      %s21 = ssub.s32 1024, 1024
      %22 = vsyncadd [#allocation4], %s21
      %s23 = sshll.u32 [#allocation3], 4
      %s24 = int_to_ptr.vmem [resolvable:$true] %s23
      %29 = dma.hbm_to_vmem [thread:$0]  %s0, 1024, %s24, [#allocation4], 128, 128, 8
    $region5: #{ex_rnn_forward.1} parent=1 // pred_fallthru
      _
    // Predicated region
    $region6: #{ex_rnn_forward.1} parent=1 // pred_check
      _
    $region7: #{ex_rnn_forward.1} parent=1 // pred_check_branch
      %31 = sbr.rel (0) target = $region9
    $region8: #{ex_rnn_forward.1} parent=1 // pred_region
      %s33 = ssub.s32 128, 128
      %34 = vsyncadd [#allocation7], %s33
      %s36 = sshll.u32 [#allocation6], 4
      %s37 = int_to_ptr.vmem [resolvable:$true] %s36
      %39 = dma.hbm_to_vmem [thread:$0]  %s1, 128, %s37, [#allocation7]
    $region9: #{ex_rnn_forward.1} parent=1 // pred_fallthru
      _
    // Predicated region
    $region10: #{ex_rnn_forward.1} parent=1 // pred_check
      _
    $region11: #{ex_rnn_forward.1} parent=1 // pred_check_branch
      %41 = sbr.rel (0) target = $region13
    $region12: #{ex_rnn_forward.1} parent=1 // pred_region
      _
    $region13: #{ex_rnn_forward.1} parent=1 // pred_fallthru
      _
    // Predicated region
    $region14: #{ex_rnn_forward.1} parent=1 // pred_check
      _
    $region15: #{ex_rnn_forward.1} parent=1 // pred_check_branch
      %43 = sbr.rel (0) target = $region17
    $region16: #{ex_rnn_forward.1} parent=1 // pred_region
      _
    $region17: #{ex_rnn_forward.1} parent=1 // pred_fallthru
      _
    // Predicated region
    $region18: #{ex_rnn_forward.1} parent=1 // pred_check
      _
    $region19: #{ex_rnn_forward.1} parent=1 // pred_check_branch
      %45 = sbr.rel (0) target = $region21
    $region20: #{ex_rnn_forward.1} parent=1 // pred_region
      _
    $region21: #{ex_rnn_forward.1} parent=1 // pred_fallthru
      _
    // Predicated region
    $region22: #{ex_rnn_forward.1} parent=1 // pred_check
      _
    $region23: #{ex_rnn_forward.1} parent=1 // pred_check_branch
      %47 = sbr.rel (0) target = $region25
    $region24: #{ex_rnn_forward.1} parent=1 // pred_region
      _
    $region25: #{ex_rnn_forward.1} parent=1 // pred_fallthru
      _
    // Predicated region
    $region26: #{ex_rnn_forward.1} parent=1 // pred_check
      _
    $region27: #{ex_rnn_forward.1} parent=1 // pred_check_branch
      %49 = sbr.rel (0) target = $region29
    $region28: #{ex_rnn_forward.1} parent=1 // pred_region
      _
    $region29: #{ex_rnn_forward.1} parent=1 // pred_fallthru
      _
    // Predicated region
    $region30: #{ex_rnn_forward.1} parent=1 // pred_check
      _
    $region31: #{ex_rnn_forward.1} parent=1 // pred_check_branch
      %51 = sbr.rel (0) target = $region33
    $region32: #{ex_rnn_forward.1} parent=1 // pred_region
      %52 = dma.done [#allocation4], 1024
    $region33: #{ex_rnn_forward.1} parent=1 // pred_fallthru
      _
    // Predicated region
    $region34: #{ex_rnn_forward.1} parent=1 // pred_check
      _
    $region35: #{ex_rnn_forward.1} parent=1 // pred_check_branch
      %54 = sbr.rel (0) target = $region37
    $region36: #{ex_rnn_forward.1} parent=1 // pred_region
      %55 = dma.done [#allocation7], 128
    $region37: #{ex_rnn_forward.1} parent=1 // pred_fallthru
      _
    %v56 = vld [vmem:[#allocation3] sm:$0xff]
    %v57 = vld [vmem:[#allocation3 + $0x8] sm:$0xff]
    %v58 = vld [vmem:[#allocation3 + $0x10] sm:$0xff]
    %v59 = vld [vmem:[#allocation3 + $0x18] sm:$0xff]
    %v60 = vld [vmem:[#allocation3 + $0x20] sm:$0xff]
    %v61 = vld [vmem:[#allocation3 + $0x28] sm:$0xff]
    %v62 = vld [vmem:[#allocation3 + $0x30] sm:$0xff]
    %v63 = vld [vmem:[#allocation3 + $0x38] sm:$0xff]
    %v64 = vld [vmem:[%s2] sm:$0xff]
    %v65 = vld [vmem:[%s2 + $0x8] sm:$0xff]
    %v66 = vld [vmem:[%s4] sm:$0x1]
    %v68 = vlaneseq
    %v69 = vshrl.u32 %v68, 7
    %v70 = vsub.s32 0, %v69
    %v71 = vrot.slane %v66, %v70
    %vm73 = vcmask 130048
    %v75 = vsel %vm73, %v56, 0
    %v78 = vsel %vm73, %v57, 0
    %v81 = vsel %vm73, %v58, 0
    %v84 = vsel %vm73, %v59, 0
    %v87 = vsel %vm73, %v60, 0
    %v90 = vsel %vm73, %v61, 0
    %v93 = vsel %vm73, %v62, 0
    %v96 = vsel %vm73, %v63, 0
    %98 = vmatprep.subr.mxu0 0.0
    %99 = vmatpush1.msra.mxu0 %v64
    %100 = vmatprep.subr.mxu0 0.0
    %101 = vmatpush1.msra.mxu0 %v65
    %102 = vmatprep.subr.mxu0 0.0
    %103 = vmatpush1.msra.mxu0 0.0
    %104 = vmatprep.subr.mxu0 0.0
    %105 = vmatpush1.msra.mxu0 0.0
    %106 = vmatprep.subr.mxu0 0.0
    %107 = vmatpush1.msra.mxu0 0.0
    %108 = vmatprep.subr.mxu0 0.0
    %109 = vmatpush1.msra.mxu0 0.0
    %110 = vmatprep.subr.mxu0 0.0
    %111 = vmatpush1.msra.mxu0 0.0
    %112 = vmatprep.subr.mxu0 0.0
    %113 = vmatpush1.msra.mxu0 0.0
    %114 = vmatprep.subr.mxu0 0.0
    %115 = vmatpush1.msra.mxu0 0.0
    %116 = vmatprep.subr.mxu0 0.0
    %117 = vmatpush1.msra.mxu0 0.0
    %118 = vmatprep.subr.mxu0 0.0
    %119 = vmatpush1.msra.mxu0 0.0
    %120 = vmatprep.subr.mxu0 0.0
    %121 = vmatpush1.msra.mxu0 0.0
    %122 = vmatprep.subr.mxu0 0.0
    %123 = vmatpush1.msra.mxu0 0.0
    %124 = vmatprep.subr.mxu0 0.0
    %125 = vmatpush1.msra.mxu0 0.0
    %126 = vmatprep.subr.mxu0 0.0
    %127 = vmatpush1.msra.mxu0 0.0
    %128 = vmatprep.subr.mxu0 0.0
    %129 = vmatpush1.msra.mxu0 0.0
    %130 = vmatprep.subr.mxu0 0.0
    %131 = vmatpush1.msra.mxu0 0.0
    %132 = vmatprep.subr.mxu0 0.0
    %133 = vmatpush1.msra.mxu0 0.0
    %134 = vmatprep.subr.mxu0 0.0
    %135 = vmatpush1.msra.mxu0 0.0
    %136 = vmatprep.subr.mxu0 0.0
    %137 = vmatpush1.msra.mxu0 0.0
    %138 = vmatprep.subr.mxu0 0.0
    %139 = vmatpush1.msra.mxu0 0.0
    %140 = vmatprep.subr.mxu0 0.0
    %141 = vmatpush1.msra.mxu0 0.0
    %142 = vmatprep.subr.mxu0 0.0
    %143 = vmatpush1.msra.mxu0 0.0
    %144 = vmatprep.subr.mxu0 0.0
    %145 = vmatpush1.msra.mxu0 0.0
    %146 = vmatprep.subr.mxu0 0.0
    %147 = vmatpush1.msra.mxu0 0.0
    %148 = vmatprep.subr.mxu0 0.0
    %149 = vmatpush1.msra.mxu0 0.0
    %150 = vmatprep.subr.mxu0 0.0
    %151 = vmatpush1.msra.mxu0 0.0
    %152 = vmatprep.subr.mxu0 0.0
    %153 = vmatpush1.msra.mxu0 0.0
    %154 = vmatprep.subr.mxu0 0.0
    %155 = vmatpush1.msra.mxu0 0.0
    %156 = vmatprep.subr.mxu0 0.0
    %157 = vmatpush1.msra.mxu0 0.0
    %158 = vmatprep.subr.mxu0 0.0
    %159 = vmatpush1.msra.mxu0 0.0
    %160 = vmatprep.subr.mxu0 0.0
    %161 = vmatpush1.msra.mxu0 0.0
    %162 = vmatprep.mubr.f32.mxu0 0.0
    %163 = vmatmul.mubr.f32.gmra.mrb[0].mxu0 %v75
    %v164 = vpop.f32.mrb[0].mxu0
    %v165 = vadd.f32 %v71, %v164
    %v166 = vpop.f32.mrb[0].mxu0
    %167 = vmatprep.mubr.f32.mxu0 0.0
    %168 = vmatmul.mubr.f32.gmra.mrb[0].mxu0 %v78
    %v169 = vpop.f32.mrb[0].mxu0
    %v170 = vadd.f32 %v71, %v169
    %v171 = vpop.f32.mrb[0].mxu0
    %172 = vmatprep.mubr.f32.mxu0 0.0
    %173 = vmatmul.mubr.f32.gmra.mrb[0].mxu0 %v81
    %v174 = vpop.f32.mrb[0].mxu0
    %v175 = vadd.f32 %v71, %v174
    %v176 = vpop.f32.mrb[0].mxu0
    %177 = vmatprep.mubr.f32.mxu0 0.0
    %178 = vmatmul.mubr.f32.gmra.mrb[0].mxu0 %v84
    %v179 = vpop.f32.mrb[0].mxu0
    %v180 = vadd.f32 %v71, %v179
    %v181 = vpop.f32.mrb[0].mxu0
    %182 = vmatprep.mubr.f32.mxu0 0.0
    %183 = vmatmul.mubr.f32.gmra.mrb[0].mxu0 %v87
    %v184 = vpop.f32.mrb[0].mxu0
    %v185 = vadd.f32 %v71, %v184
    %v186 = vpop.f32.mrb[0].mxu0
    %187 = vmatprep.mubr.f32.mxu0 0.0
    %188 = vmatmul.mubr.f32.gmra.mrb[0].mxu0 %v90
    %v189 = vpop.f32.mrb[0].mxu0
    %v190 = vadd.f32 %v71, %v189
    %v191 = vpop.f32.mrb[0].mxu0
    %192 = vmatprep.mubr.f32.mxu0 0.0
    %193 = vmatmul.mubr.f32.gmra.mrb[0].mxu0 %v93
    %v194 = vpop.f32.mrb[0].mxu0
    %v195 = vadd.f32 %v71, %v194
    %v196 = vpop.f32.mrb[0].mxu0
    %197 = vmatprep.mubr.f32.mxu0 0.0
    %198 = vmatmul.mubr.f32.gmra.mrb[0].mxu0 %v96
    %v199 = vpop.f32.mrb[0].mxu0
    %v200 = vadd.f32 %v71, %v199
    %v201 = vpop.f32.mrb[0].mxu0
    %202 = vdwg.mxu0
    %v203 = vld [vmem:[%s3] sm:$0xff]
    %v204 = vld [vmem:[%s3 + $0x8] sm:$0xff]
    %v205 = vld [vmem:[%s3 + $0x10] sm:$0xff]
    %v206 = vld [vmem:[%s3 + $0x18] sm:$0xff]
    %v207 = vld [vmem:[#allocation6] sm:$0xff]
    %vm208 = vcmask 261120
    %v210 = vsel %vm208, %v207, 0
    %212 = vmatprep.subr.mxu0 0.0
    %213 = vmatpush1.msra.mxu0 %v203
    %214 = vmatprep.subr.mxu0 0.0
    %215 = vmatpush1.msra.mxu0 %v204
    %216 = vmatprep.subr.mxu0 0.0
    %217 = vmatpush1.msra.mxu0 %v205
    %218 = vmatprep.subr.mxu0 0.0
    %219 = vmatpush1.msra.mxu0 %v206
    %220 = vmatprep.subr.mxu0 0.0
    %221 = vmatpush1.msra.mxu0 0.0
    %222 = vmatprep.subr.mxu0 0.0
    %223 = vmatpush1.msra.mxu0 0.0
    %224 = vmatprep.subr.mxu0 0.0
    %225 = vmatpush1.msra.mxu0 0.0
    %226 = vmatprep.subr.mxu0 0.0
    %227 = vmatpush1.msra.mxu0 0.0
    %228 = vmatprep.subr.mxu0 0.0
    %229 = vmatpush1.msra.mxu0 0.0
    %230 = vmatprep.subr.mxu0 0.0
    %231 = vmatpush1.msra.mxu0 0.0
    %232 = vmatprep.subr.mxu0 0.0
    %233 = vmatpush1.msra.mxu0 0.0
    %234 = vmatprep.subr.mxu0 0.0
    %235 = vmatpush1.msra.mxu0 0.0
    %236 = vmatprep.subr.mxu0 0.0
    %237 = vmatpush1.msra.mxu0 0.0
    %238 = vmatprep.subr.mxu0 0.0
    %239 = vmatpush1.msra.mxu0 0.0
    %240 = vmatprep.subr.mxu0 0.0
    %241 = vmatpush1.msra.mxu0 0.0
    %242 = vmatprep.subr.mxu0 0.0
    %243 = vmatpush1.msra.mxu0 0.0
    %244 = vmatprep.subr.mxu0 0.0
    %245 = vmatpush1.msra.mxu0 0.0
    %246 = vmatprep.subr.mxu0 0.0
    %247 = vmatpush1.msra.mxu0 0.0
    %248 = vmatprep.subr.mxu0 0.0
    %249 = vmatpush1.msra.mxu0 0.0
    %250 = vmatprep.subr.mxu0 0.0
    %251 = vmatpush1.msra.mxu0 0.0
    %252 = vmatprep.subr.mxu0 0.0
    %253 = vmatpush1.msra.mxu0 0.0
    %254 = vmatprep.subr.mxu0 0.0
    %255 = vmatpush1.msra.mxu0 0.0
    %256 = vmatprep.subr.mxu0 0.0
    %257 = vmatpush1.msra.mxu0 0.0
    %258 = vmatprep.subr.mxu0 0.0
    %259 = vmatpush1.msra.mxu0 0.0
    %260 = vmatprep.subr.mxu0 0.0
    %261 = vmatpush1.msra.mxu0 0.0
    %262 = vmatprep.subr.mxu0 0.0
    %263 = vmatpush1.msra.mxu0 0.0
    %264 = vmatprep.subr.mxu0 0.0
    %265 = vmatpush1.msra.mxu0 0.0
    %266 = vmatprep.subr.mxu0 0.0
    %267 = vmatpush1.msra.mxu0 0.0
    %268 = vmatprep.subr.mxu0 0.0
    %269 = vmatpush1.msra.mxu0 0.0
    %270 = vmatprep.subr.mxu0 0.0
    %271 = vmatpush1.msra.mxu0 0.0
    %272 = vmatprep.subr.mxu0 0.0
    %273 = vmatpush1.msra.mxu0 0.0
    %274 = vmatprep.subr.mxu0 0.0
    %275 = vmatpush1.msra.mxu0 0.0
    %276 = vmatprep.mubr.f32.mxu0 0.0
    %277 = vmatmul.mubr.f32.gmra.mrb[0].mxu0 %v210
    %v278 = vpop.f32.mrb[0].mxu0
    %v279 = vadd.f32 0.0, %v278
    %v280 = vpop.f32.mrb[0].mxu0
    %281 = vdwg.mxu0
    %v282 = vadd.f32 %v165, %v279
    %v283 = vtanh.pop %v282
    %284 = vst.msk [vmem:[#allocation2] sm:$0xff] %vm208, %v283
    %v286 = vsel %vm208, %v283, 0
    %288 = vmatprep.subr.mxu0 0.0
    %289 = vmatpush1.msra.mxu0 %v203
    %290 = vmatprep.subr.mxu0 0.0
    %291 = vmatpush1.msra.mxu0 %v204
    %292 = vmatprep.subr.mxu0 0.0
    %293 = vmatpush1.msra.mxu0 %v205
    %294 = vmatprep.subr.mxu0 0.0
    %295 = vmatpush1.msra.mxu0 %v206
    %296 = vmatprep.subr.mxu0 0.0
    %297 = vmatpush1.msra.mxu0 0.0
    %298 = vmatprep.subr.mxu0 0.0
    %299 = vmatpush1.msra.mxu0 0.0
    %300 = vmatprep.subr.mxu0 0.0
    %301 = vmatpush1.msra.mxu0 0.0
    %302 = vmatprep.subr.mxu0 0.0
    %303 = vmatpush1.msra.mxu0 0.0
    %304 = vmatprep.subr.mxu0 0.0
    %305 = vmatpush1.msra.mxu0 0.0
    %306 = vmatprep.subr.mxu0 0.0
    %307 = vmatpush1.msra.mxu0 0.0
    %308 = vmatprep.subr.mxu0 0.0
    %309 = vmatpush1.msra.mxu0 0.0
    %310 = vmatprep.subr.mxu0 0.0
    %311 = vmatpush1.msra.mxu0 0.0
    %312 = vmatprep.subr.mxu0 0.0
    %313 = vmatpush1.msra.mxu0 0.0
    %314 = vmatprep.subr.mxu0 0.0
    %315 = vmatpush1.msra.mxu0 0.0
    %316 = vmatprep.subr.mxu0 0.0
    %317 = vmatpush1.msra.mxu0 0.0
    %318 = vmatprep.subr.mxu0 0.0
    %319 = vmatpush1.msra.mxu0 0.0
    %320 = vmatprep.subr.mxu0 0.0
    %321 = vmatpush1.msra.mxu0 0.0
    %322 = vmatprep.subr.mxu0 0.0
    %323 = vmatpush1.msra.mxu0 0.0
    %324 = vmatprep.subr.mxu0 0.0
    %325 = vmatpush1.msra.mxu0 0.0
    %326 = vmatprep.subr.mxu0 0.0
    %327 = vmatpush1.msra.mxu0 0.0
    %328 = vmatprep.subr.mxu0 0.0
    %329 = vmatpush1.msra.mxu0 0.0
    %330 = vmatprep.subr.mxu0 0.0
    %331 = vmatpush1.msra.mxu0 0.0
    %332 = vmatprep.subr.mxu0 0.0
    %333 = vmatpush1.msra.mxu0 0.0
    %334 = vmatprep.subr.mxu0 0.0
    %335 = vmatpush1.msra.mxu0 0.0
    %336 = vmatprep.subr.mxu0 0.0
    %337 = vmatpush1.msra.mxu0 0.0
    %338 = vmatprep.subr.mxu0 0.0
    %339 = vmatpush1.msra.mxu0 0.0
    %340 = vmatprep.subr.mxu0 0.0
    %341 = vmatpush1.msra.mxu0 0.0
    %342 = vmatprep.subr.mxu0 0.0
    %343 = vmatpush1.msra.mxu0 0.0
    %344 = vmatprep.subr.mxu0 0.0
    %345 = vmatpush1.msra.mxu0 0.0
    %346 = vmatprep.subr.mxu0 0.0
    %347 = vmatpush1.msra.mxu0 0.0
    %348 = vmatprep.subr.mxu0 0.0
    %349 = vmatpush1.msra.mxu0 0.0
    %350 = vmatprep.subr.mxu0 0.0
    %351 = vmatpush1.msra.mxu0 0.0
    %352 = vmatprep.mubr.f32.mxu0 0.0
    %353 = vmatmul.mubr.f32.gmra.mrb[0].mxu0 %v286
    %v354 = vpop.f32.mrb[0].mxu0
    %v355 = vadd.f32 0.0, %v354
    %v356 = vpop.f32.mrb[0].mxu0
    %357 = vdwg.mxu0
    %v358 = vadd.f32 %v170, %v355
    %v359 = vtanh.pop %v358
    %s360 = scalar_lea.vmem [#allocation2], 8
    %361 = vst.msk [vmem:[%s360] sm:$0xff] %vm208, %v359
    %v363 = vsel %vm208, %v359, 0
    %365 = vmatprep.subr.mxu0 0.0
    %366 = vmatpush1.msra.mxu0 %v203
    %367 = vmatprep.subr.mxu0 0.0
    %368 = vmatpush1.msra.mxu0 %v204
    %369 = vmatprep.subr.mxu0 0.0
    %370 = vmatpush1.msra.mxu0 %v205
    %371 = vmatprep.subr.mxu0 0.0
    %372 = vmatpush1.msra.mxu0 %v206
    %373 = vmatprep.subr.mxu0 0.0
    %374 = vmatpush1.msra.mxu0 0.0
    %375 = vmatprep.subr.mxu0 0.0
    %376 = vmatpush1.msra.mxu0 0.0
    %377 = vmatprep.subr.mxu0 0.0
    %378 = vmatpush1.msra.mxu0 0.0
    %379 = vmatprep.subr.mxu0 0.0
    %380 = vmatpush1.msra.mxu0 0.0
    %381 = vmatprep.subr.mxu0 0.0
    %382 = vmatpush1.msra.mxu0 0.0
    %383 = vmatprep.subr.mxu0 0.0
    %384 = vmatpush1.msra.mxu0 0.0
    %385 = vmatprep.subr.mxu0 0.0
    %386 = vmatpush1.msra.mxu0 0.0
    %387 = vmatprep.subr.mxu0 0.0
    %388 = vmatpush1.msra.mxu0 0.0
    %389 = vmatprep.subr.mxu0 0.0
    %390 = vmatpush1.msra.mxu0 0.0
    %391 = vmatprep.subr.mxu0 0.0
    %392 = vmatpush1.msra.mxu0 0.0
    %393 = vmatprep.subr.mxu0 0.0
    %394 = vmatpush1.msra.mxu0 0.0
    %395 = vmatprep.subr.mxu0 0.0
    %396 = vmatpush1.msra.mxu0 0.0
    %397 = vmatprep.subr.mxu0 0.0
    %398 = vmatpush1.msra.mxu0 0.0
    %399 = vmatprep.subr.mxu0 0.0
    %400 = vmatpush1.msra.mxu0 0.0
    %401 = vmatprep.subr.mxu0 0.0
    %402 = vmatpush1.msra.mxu0 0.0
    %403 = vmatprep.subr.mxu0 0.0
    %404 = vmatpush1.msra.mxu0 0.0
    %405 = vmatprep.subr.mxu0 0.0
    %406 = vmatpush1.msra.mxu0 0.0
    %407 = vmatprep.subr.mxu0 0.0
    %408 = vmatpush1.msra.mxu0 0.0
    %409 = vmatprep.subr.mxu0 0.0
    %410 = vmatpush1.msra.mxu0 0.0
    %411 = vmatprep.subr.mxu0 0.0
    %412 = vmatpush1.msra.mxu0 0.0
    %413 = vmatprep.subr.mxu0 0.0
    %414 = vmatpush1.msra.mxu0 0.0
    %415 = vmatprep.subr.mxu0 0.0
    %416 = vmatpush1.msra.mxu0 0.0
    %417 = vmatprep.subr.mxu0 0.0
    %418 = vmatpush1.msra.mxu0 0.0
    %419 = vmatprep.subr.mxu0 0.0
    %420 = vmatpush1.msra.mxu0 0.0
    %421 = vmatprep.subr.mxu0 0.0
    %422 = vmatpush1.msra.mxu0 0.0
    %423 = vmatprep.subr.mxu0 0.0
    %424 = vmatpush1.msra.mxu0 0.0
    %425 = vmatprep.subr.mxu0 0.0
    %426 = vmatpush1.msra.mxu0 0.0
    %427 = vmatprep.subr.mxu0 0.0
    %428 = vmatpush1.msra.mxu0 0.0
    %429 = vmatprep.mubr.f32.mxu0 0.0
    %430 = vmatmul.mubr.f32.gmra.mrb[0].mxu0 %v363
    %v431 = vpop.f32.mrb[0].mxu0
    %v432 = vadd.f32 0.0, %v431
    %v433 = vpop.f32.mrb[0].mxu0
    %434 = vdwg.mxu0
    %v435 = vadd.f32 %v175, %v432
    %v436 = vtanh.pop %v435
    %s437 = scalar_lea.vmem [#allocation2], 16
    %438 = vst.msk [vmem:[%s437] sm:$0xff] %vm208, %v436
    %v440 = vsel %vm208, %v436, 0
    %442 = vmatprep.subr.mxu0 0.0
    %443 = vmatpush1.msra.mxu0 %v203
    %444 = vmatprep.subr.mxu0 0.0
    %445 = vmatpush1.msra.mxu0 %v204
    %446 = vmatprep.subr.mxu0 0.0
    %447 = vmatpush1.msra.mxu0 %v205
    %448 = vmatprep.subr.mxu0 0.0
    %449 = vmatpush1.msra.mxu0 %v206
    %450 = vmatprep.subr.mxu0 0.0
    %451 = vmatpush1.msra.mxu0 0.0
    %452 = vmatprep.subr.mxu0 0.0
    %453 = vmatpush1.msra.mxu0 0.0
    %454 = vmatprep.subr.mxu0 0.0
    %455 = vmatpush1.msra.mxu0 0.0
    %456 = vmatprep.subr.mxu0 0.0
    %457 = vmatpush1.msra.mxu0 0.0
    %458 = vmatprep.subr.mxu0 0.0
    %459 = vmatpush1.msra.mxu0 0.0
    %460 = vmatprep.subr.mxu0 0.0
    %461 = vmatpush1.msra.mxu0 0.0
    %462 = vmatprep.subr.mxu0 0.0
    %463 = vmatpush1.msra.mxu0 0.0
    %464 = vmatprep.subr.mxu0 0.0
    %465 = vmatpush1.msra.mxu0 0.0
    %466 = vmatprep.subr.mxu0 0.0
    %467 = vmatpush1.msra.mxu0 0.0
    %468 = vmatprep.subr.mxu0 0.0
    %469 = vmatpush1.msra.mxu0 0.0
    %470 = vmatprep.subr.mxu0 0.0
    %471 = vmatpush1.msra.mxu0 0.0
    %472 = vmatprep.subr.mxu0 0.0
    %473 = vmatpush1.msra.mxu0 0.0
    %474 = vmatprep.subr.mxu0 0.0
    %475 = vmatpush1.msra.mxu0 0.0
    %476 = vmatprep.subr.mxu0 0.0
    %477 = vmatpush1.msra.mxu0 0.0
    %478 = vmatprep.subr.mxu0 0.0
    %479 = vmatpush1.msra.mxu0 0.0
    %480 = vmatprep.subr.mxu0 0.0
    %481 = vmatpush1.msra.mxu0 0.0
    %482 = vmatprep.subr.mxu0 0.0
    %483 = vmatpush1.msra.mxu0 0.0
    %484 = vmatprep.subr.mxu0 0.0
    %485 = vmatpush1.msra.mxu0 0.0
    %486 = vmatprep.subr.mxu0 0.0
    %487 = vmatpush1.msra.mxu0 0.0
    %488 = vmatprep.subr.mxu0 0.0
    %489 = vmatpush1.msra.mxu0 0.0
    %490 = vmatprep.subr.mxu0 0.0
    %491 = vmatpush1.msra.mxu0 0.0
    %492 = vmatprep.subr.mxu0 0.0
    %493 = vmatpush1.msra.mxu0 0.0
    %494 = vmatprep.subr.mxu0 0.0
    %495 = vmatpush1.msra.mxu0 0.0
    %496 = vmatprep.subr.mxu0 0.0
    %497 = vmatpush1.msra.mxu0 0.0
    %498 = vmatprep.subr.mxu0 0.0
    %499 = vmatpush1.msra.mxu0 0.0
    %500 = vmatprep.subr.mxu0 0.0
    %501 = vmatpush1.msra.mxu0 0.0
    %502 = vmatprep.subr.mxu0 0.0
    %503 = vmatpush1.msra.mxu0 0.0
    %504 = vmatprep.subr.mxu0 0.0
    %505 = vmatpush1.msra.mxu0 0.0
    %506 = vmatprep.mubr.f32.mxu0 0.0
    %507 = vmatmul.mubr.f32.gmra.mrb[0].mxu0 %v440
    %v508 = vpop.f32.mrb[0].mxu0
    %v509 = vadd.f32 0.0, %v508
    %v510 = vpop.f32.mrb[0].mxu0
    %511 = vdwg.mxu0
    %v512 = vadd.f32 %v180, %v509
    %v513 = vtanh.pop %v512
    %s514 = scalar_lea.vmem [#allocation2], 24
    %515 = vst.msk [vmem:[%s514] sm:$0xff] %vm208, %v513
    %v517 = vsel %vm208, %v513, 0
    %519 = vmatprep.subr.mxu0 0.0
    %520 = vmatpush1.msra.mxu0 %v203
    %521 = vmatprep.subr.mxu0 0.0
    %522 = vmatpush1.msra.mxu0 %v204
    %523 = vmatprep.subr.mxu0 0.0
    %524 = vmatpush1.msra.mxu0 %v205
    %525 = vmatprep.subr.mxu0 0.0
    %526 = vmatpush1.msra.mxu0 %v206
    %527 = vmatprep.subr.mxu0 0.0
    %528 = vmatpush1.msra.mxu0 0.0
    %529 = vmatprep.subr.mxu0 0.0
    %530 = vmatpush1.msra.mxu0 0.0
    %531 = vmatprep.subr.mxu0 0.0
    %532 = vmatpush1.msra.mxu0 0.0
    %533 = vmatprep.subr.mxu0 0.0
    %534 = vmatpush1.msra.mxu0 0.0
    %535 = vmatprep.subr.mxu0 0.0
    %536 = vmatpush1.msra.mxu0 0.0
    %537 = vmatprep.subr.mxu0 0.0
    %538 = vmatpush1.msra.mxu0 0.0
    %539 = vmatprep.subr.mxu0 0.0
    %540 = vmatpush1.msra.mxu0 0.0
    %541 = vmatprep.subr.mxu0 0.0
    %542 = vmatpush1.msra.mxu0 0.0
    %543 = vmatprep.subr.mxu0 0.0
    %544 = vmatpush1.msra.mxu0 0.0
    %545 = vmatprep.subr.mxu0 0.0
    %546 = vmatpush1.msra.mxu0 0.0
    %547 = vmatprep.subr.mxu0 0.0
    %548 = vmatpush1.msra.mxu0 0.0
    %549 = vmatprep.subr.mxu0 0.0
    %550 = vmatpush1.msra.mxu0 0.0
    %551 = vmatprep.subr.mxu0 0.0
    %552 = vmatpush1.msra.mxu0 0.0
    %553 = vmatprep.subr.mxu0 0.0
    %554 = vmatpush1.msra.mxu0 0.0
    %555 = vmatprep.subr.mxu0 0.0
    %556 = vmatpush1.msra.mxu0 0.0
    %557 = vmatprep.subr.mxu0 0.0
    %558 = vmatpush1.msra.mxu0 0.0
    %559 = vmatprep.subr.mxu0 0.0
    %560 = vmatpush1.msra.mxu0 0.0
    %561 = vmatprep.subr.mxu0 0.0
    %562 = vmatpush1.msra.mxu0 0.0
    %563 = vmatprep.subr.mxu0 0.0
    %564 = vmatpush1.msra.mxu0 0.0
    %565 = vmatprep.subr.mxu0 0.0
    %566 = vmatpush1.msra.mxu0 0.0
    %567 = vmatprep.subr.mxu0 0.0
    %568 = vmatpush1.msra.mxu0 0.0
    %569 = vmatprep.subr.mxu0 0.0
    %570 = vmatpush1.msra.mxu0 0.0
    %571 = vmatprep.subr.mxu0 0.0
    %572 = vmatpush1.msra.mxu0 0.0
    %573 = vmatprep.subr.mxu0 0.0
    %574 = vmatpush1.msra.mxu0 0.0
    %575 = vmatprep.subr.mxu0 0.0
    %576 = vmatpush1.msra.mxu0 0.0
    %577 = vmatprep.subr.mxu0 0.0
    %578 = vmatpush1.msra.mxu0 0.0
    %579 = vmatprep.subr.mxu0 0.0
    %580 = vmatpush1.msra.mxu0 0.0
    %581 = vmatprep.subr.mxu0 0.0
    %582 = vmatpush1.msra.mxu0 0.0
    %583 = vmatprep.mubr.f32.mxu0 0.0
    %584 = vmatmul.mubr.f32.gmra.mrb[0].mxu0 %v517
    %v585 = vpop.f32.mrb[0].mxu0
    %v586 = vadd.f32 0.0, %v585
    %v587 = vpop.f32.mrb[0].mxu0
    %588 = vdwg.mxu0
    %v589 = vadd.f32 %v185, %v586
    %v590 = vtanh.pop %v589
    %s591 = scalar_lea.vmem [#allocation2], 32
    %592 = vst.msk [vmem:[%s591] sm:$0xff] %vm208, %v590
    %v594 = vsel %vm208, %v590, 0
    %596 = vmatprep.subr.mxu0 0.0
    %597 = vmatpush1.msra.mxu0 %v203
    %598 = vmatprep.subr.mxu0 0.0
    %599 = vmatpush1.msra.mxu0 %v204
    %600 = vmatprep.subr.mxu0 0.0
    %601 = vmatpush1.msra.mxu0 %v205
    %602 = vmatprep.subr.mxu0 0.0
    %603 = vmatpush1.msra.mxu0 %v206
    %604 = vmatprep.subr.mxu0 0.0
    %605 = vmatpush1.msra.mxu0 0.0
    %606 = vmatprep.subr.mxu0 0.0
    %607 = vmatpush1.msra.mxu0 0.0
    %608 = vmatprep.subr.mxu0 0.0
    %609 = vmatpush1.msra.mxu0 0.0
    %610 = vmatprep.subr.mxu0 0.0
    %611 = vmatpush1.msra.mxu0 0.0
    %612 = vmatprep.subr.mxu0 0.0
    %613 = vmatpush1.msra.mxu0 0.0
    %614 = vmatprep.subr.mxu0 0.0
    %615 = vmatpush1.msra.mxu0 0.0
    %616 = vmatprep.subr.mxu0 0.0
    %617 = vmatpush1.msra.mxu0 0.0
    %618 = vmatprep.subr.mxu0 0.0
    %619 = vmatpush1.msra.mxu0 0.0
    %620 = vmatprep.subr.mxu0 0.0
    %621 = vmatpush1.msra.mxu0 0.0
    %622 = vmatprep.subr.mxu0 0.0
    %623 = vmatpush1.msra.mxu0 0.0
    %624 = vmatprep.subr.mxu0 0.0
    %625 = vmatpush1.msra.mxu0 0.0
    %626 = vmatprep.subr.mxu0 0.0
    %627 = vmatpush1.msra.mxu0 0.0
    %628 = vmatprep.subr.mxu0 0.0
    %629 = vmatpush1.msra.mxu0 0.0
    %630 = vmatprep.subr.mxu0 0.0
    %631 = vmatpush1.msra.mxu0 0.0
    %632 = vmatprep.subr.mxu0 0.0
    %633 = vmatpush1.msra.mxu0 0.0
    %634 = vmatprep.subr.mxu0 0.0
    %635 = vmatpush1.msra.mxu0 0.0
    %636 = vmatprep.subr.mxu0 0.0
    %637 = vmatpush1.msra.mxu0 0.0
    %638 = vmatprep.subr.mxu0 0.0
    %639 = vmatpush1.msra.mxu0 0.0
    %640 = vmatprep.subr.mxu0 0.0
    %641 = vmatpush1.msra.mxu0 0.0
    %642 = vmatprep.subr.mxu0 0.0
    %643 = vmatpush1.msra.mxu0 0.0
    %644 = vmatprep.subr.mxu0 0.0
    %645 = vmatpush1.msra.mxu0 0.0
    %646 = vmatprep.subr.mxu0 0.0
    %647 = vmatpush1.msra.mxu0 0.0
    %648 = vmatprep.subr.mxu0 0.0
    %649 = vmatpush1.msra.mxu0 0.0
    %650 = vmatprep.subr.mxu0 0.0
    %651 = vmatpush1.msra.mxu0 0.0
    %652 = vmatprep.subr.mxu0 0.0
    %653 = vmatpush1.msra.mxu0 0.0
    %654 = vmatprep.subr.mxu0 0.0
    %655 = vmatpush1.msra.mxu0 0.0
    %656 = vmatprep.subr.mxu0 0.0
    %657 = vmatpush1.msra.mxu0 0.0
    %658 = vmatprep.subr.mxu0 0.0
    %659 = vmatpush1.msra.mxu0 0.0
    %660 = vmatprep.mubr.f32.mxu0 0.0
    %661 = vmatmul.mubr.f32.gmra.mrb[0].mxu0 %v594
    %v662 = vpop.f32.mrb[0].mxu0
    %v663 = vadd.f32 0.0, %v662
    %v664 = vpop.f32.mrb[0].mxu0
    %665 = vdwg.mxu0
    %v666 = vadd.f32 %v190, %v663
    %v667 = vtanh.pop %v666
    %s668 = scalar_lea.vmem [#allocation2], 40
    %669 = vst.msk [vmem:[%s668] sm:$0xff] %vm208, %v667
    %v671 = vsel %vm208, %v667, 0
    %673 = vmatprep.subr.mxu0 0.0
    %674 = vmatpush1.msra.mxu0 %v203
    %675 = vmatprep.subr.mxu0 0.0
    %676 = vmatpush1.msra.mxu0 %v204
    %677 = vmatprep.subr.mxu0 0.0
    %678 = vmatpush1.msra.mxu0 %v205
    %679 = vmatprep.subr.mxu0 0.0
    %680 = vmatpush1.msra.mxu0 %v206
    %681 = vmatprep.subr.mxu0 0.0
    %682 = vmatpush1.msra.mxu0 0.0
    %683 = vmatprep.subr.mxu0 0.0
    %684 = vmatpush1.msra.mxu0 0.0
    %685 = vmatprep.subr.mxu0 0.0
    %686 = vmatpush1.msra.mxu0 0.0
    %687 = vmatprep.subr.mxu0 0.0
    %688 = vmatpush1.msra.mxu0 0.0
    %689 = vmatprep.subr.mxu0 0.0
    %690 = vmatpush1.msra.mxu0 0.0
    %691 = vmatprep.subr.mxu0 0.0
    %692 = vmatpush1.msra.mxu0 0.0
    %693 = vmatprep.subr.mxu0 0.0
    %694 = vmatpush1.msra.mxu0 0.0
    %695 = vmatprep.subr.mxu0 0.0
    %696 = vmatpush1.msra.mxu0 0.0
    %697 = vmatprep.subr.mxu0 0.0
    %698 = vmatpush1.msra.mxu0 0.0
    %699 = vmatprep.subr.mxu0 0.0
    %700 = vmatpush1.msra.mxu0 0.0
    %701 = vmatprep.subr.mxu0 0.0
    %702 = vmatpush1.msra.mxu0 0.0
    %703 = vmatprep.subr.mxu0 0.0
    %704 = vmatpush1.msra.mxu0 0.0
    %705 = vmatprep.subr.mxu0 0.0
    %706 = vmatpush1.msra.mxu0 0.0
    %707 = vmatprep.subr.mxu0 0.0
    %708 = vmatpush1.msra.mxu0 0.0
    %709 = vmatprep.subr.mxu0 0.0
    %710 = vmatpush1.msra.mxu0 0.0
    %711 = vmatprep.subr.mxu0 0.0
    %712 = vmatpush1.msra.mxu0 0.0
    %713 = vmatprep.subr.mxu0 0.0
    %714 = vmatpush1.msra.mxu0 0.0
    %715 = vmatprep.subr.mxu0 0.0
    %716 = vmatpush1.msra.mxu0 0.0
    %717 = vmatprep.subr.mxu0 0.0
    %718 = vmatpush1.msra.mxu0 0.0
    %719 = vmatprep.subr.mxu0 0.0
    %720 = vmatpush1.msra.mxu0 0.0
    %721 = vmatprep.subr.mxu0 0.0
    %722 = vmatpush1.msra.mxu0 0.0
    %723 = vmatprep.subr.mxu0 0.0
    %724 = vmatpush1.msra.mxu0 0.0
    %725 = vmatprep.subr.mxu0 0.0
    %726 = vmatpush1.msra.mxu0 0.0
    %727 = vmatprep.subr.mxu0 0.0
    %728 = vmatpush1.msra.mxu0 0.0
    %729 = vmatprep.subr.mxu0 0.0
    %730 = vmatpush1.msra.mxu0 0.0
    %731 = vmatprep.subr.mxu0 0.0
    %732 = vmatpush1.msra.mxu0 0.0
    %733 = vmatprep.subr.mxu0 0.0
    %734 = vmatpush1.msra.mxu0 0.0
    %735 = vmatprep.subr.mxu0 0.0
    %736 = vmatpush1.msra.mxu0 0.0
    %737 = vmatprep.mubr.f32.mxu0 0.0
    %738 = vmatmul.mubr.f32.gmra.mrb[0].mxu0 %v671
    %v739 = vpop.f32.mrb[0].mxu0
    %v740 = vadd.f32 0.0, %v739
    %v741 = vpop.f32.mrb[0].mxu0
    %742 = vdwg.mxu0
    %v743 = vadd.f32 %v195, %v740
    %v744 = vtanh.pop %v743
    %s745 = scalar_lea.vmem [#allocation2], 48
    %746 = vst.msk [vmem:[%s745] sm:$0xff] %vm208, %v744
    %v748 = vsel %vm208, %v744, 0
    %750 = vmatprep.subr.mxu0 0.0
    %751 = vmatpush1.msra.mxu0 %v203
    %752 = vmatprep.subr.mxu0 0.0
    %753 = vmatpush1.msra.mxu0 %v204
    %754 = vmatprep.subr.mxu0 0.0
    %755 = vmatpush1.msra.mxu0 %v205
    %756 = vmatprep.subr.mxu0 0.0
    %757 = vmatpush1.msra.mxu0 %v206
    %758 = vmatprep.subr.mxu0 0.0
    %759 = vmatpush1.msra.mxu0 0.0
    %760 = vmatprep.subr.mxu0 0.0
    %761 = vmatpush1.msra.mxu0 0.0
    %762 = vmatprep.subr.mxu0 0.0
    %763 = vmatpush1.msra.mxu0 0.0
    %764 = vmatprep.subr.mxu0 0.0
    %765 = vmatpush1.msra.mxu0 0.0
    %766 = vmatprep.subr.mxu0 0.0
    %767 = vmatpush1.msra.mxu0 0.0
    %768 = vmatprep.subr.mxu0 0.0
    %769 = vmatpush1.msra.mxu0 0.0
    %770 = vmatprep.subr.mxu0 0.0
    %771 = vmatpush1.msra.mxu0 0.0
    %772 = vmatprep.subr.mxu0 0.0
    %773 = vmatpush1.msra.mxu0 0.0
    %774 = vmatprep.subr.mxu0 0.0
    %775 = vmatpush1.msra.mxu0 0.0
    %776 = vmatprep.subr.mxu0 0.0
    %777 = vmatpush1.msra.mxu0 0.0
    %778 = vmatprep.subr.mxu0 0.0
    %779 = vmatpush1.msra.mxu0 0.0
    %780 = vmatprep.subr.mxu0 0.0
    %781 = vmatpush1.msra.mxu0 0.0
    %782 = vmatprep.subr.mxu0 0.0
    %783 = vmatpush1.msra.mxu0 0.0
    %784 = vmatprep.subr.mxu0 0.0
    %785 = vmatpush1.msra.mxu0 0.0
    %786 = vmatprep.subr.mxu0 0.0
    %787 = vmatpush1.msra.mxu0 0.0
    %788 = vmatprep.subr.mxu0 0.0
    %789 = vmatpush1.msra.mxu0 0.0
    %790 = vmatprep.subr.mxu0 0.0
    %791 = vmatpush1.msra.mxu0 0.0
    %792 = vmatprep.subr.mxu0 0.0
    %793 = vmatpush1.msra.mxu0 0.0
    %794 = vmatprep.subr.mxu0 0.0
    %795 = vmatpush1.msra.mxu0 0.0
    %796 = vmatprep.subr.mxu0 0.0
    %797 = vmatpush1.msra.mxu0 0.0
    %798 = vmatprep.subr.mxu0 0.0
    %799 = vmatpush1.msra.mxu0 0.0
    %800 = vmatprep.subr.mxu0 0.0
    %801 = vmatpush1.msra.mxu0 0.0
    %802 = vmatprep.subr.mxu0 0.0
    %803 = vmatpush1.msra.mxu0 0.0
    %804 = vmatprep.subr.mxu0 0.0
    %805 = vmatpush1.msra.mxu0 0.0
    %806 = vmatprep.subr.mxu0 0.0
    %807 = vmatpush1.msra.mxu0 0.0
    %808 = vmatprep.subr.mxu0 0.0
    %809 = vmatpush1.msra.mxu0 0.0
    %810 = vmatprep.subr.mxu0 0.0
    %811 = vmatpush1.msra.mxu0 0.0
    %812 = vmatprep.subr.mxu0 0.0
    %813 = vmatpush1.msra.mxu0 0.0
    %814 = vmatprep.mubr.f32.mxu0 0.0
    %815 = vmatmul.mubr.f32.gmra.mrb[0].mxu0 %v748
    %v816 = vpop.f32.mrb[0].mxu0
    %v817 = vadd.f32 0.0, %v816
    %v818 = vpop.f32.mrb[0].mxu0
    %819 = vdwg.mxu0
    %v820 = vadd.f32 %v200, %v817
    %v821 = vtanh.pop %v820
    %s822 = scalar_lea.vmem [#allocation2], 56
    %823 = vst.msk [vmem:[%s822] sm:$0xff] %vm208, %v821
    %824 = vst.msk [vmem:[#allocation9] sm:$0xff] %vm208, %v821
    %v825 = vld [vmem:[#allocation2] sm:$0xff]
    %v826 = vld [vmem:[#allocation2 + $0x8] sm:$0xff]
    %v827 = vld [vmem:[#allocation2 + $0x10] sm:$0xff]
    %v828 = vld [vmem:[#allocation2 + $0x18] sm:$0xff]
    %v829 = vld [vmem:[#allocation2 + $0x20] sm:$0xff]
    %v830 = vld [vmem:[#allocation2 + $0x28] sm:$0xff]
    %v831 = vld [vmem:[#allocation2 + $0x30] sm:$0xff]
    %v832 = vld [vmem:[#allocation2 + $0x38] sm:$0xff]
    %v833 = vld [vmem:[%s5] sm:$0xff]
    %v834 = vld [vmem:[%s5 + $0x8] sm:$0xff]
    %v835 = vld [vmem:[%s5 + $0x10] sm:$0xff]
    %v836 = vld [vmem:[%s5 + $0x18] sm:$0xff]
    %v837 = vld [vmem:[%s6] sm:$0x1]
    %v839 = vlaneseq
    %v840 = vshrl.u32 %v839, 7
    %v841 = vsub.s32 0, %v840
    %v842 = vrot.slane %v837, %v841
    %v845 = vsel %vm208, %v825, 0
    %v848 = vsel %vm208, %v826, 0
    %v851 = vsel %vm208, %v827, 0
    %v854 = vsel %vm208, %v828, 0
    %v857 = vsel %vm208, %v829, 0
    %v860 = vsel %vm208, %v830, 0
    %v863 = vsel %vm208, %v831, 0
    %v866 = vsel %vm208, %v832, 0
    %868 = vmatprep.subr.mxu0 0.0
    %869 = vmatpush1.msra.mxu0 %v833
    %870 = vmatprep.subr.mxu0 0.0
    %871 = vmatpush1.msra.mxu0 %v834
    %872 = vmatprep.subr.mxu0 0.0
    %873 = vmatpush1.msra.mxu0 %v835
    %874 = vmatprep.subr.mxu0 0.0
    %875 = vmatpush1.msra.mxu0 %v836
    %876 = vmatprep.subr.mxu0 0.0
    %877 = vmatpush1.msra.mxu0 0.0
    %878 = vmatprep.subr.mxu0 0.0
    %879 = vmatpush1.msra.mxu0 0.0
    %880 = vmatprep.subr.mxu0 0.0
    %881 = vmatpush1.msra.mxu0 0.0
    %882 = vmatprep.subr.mxu0 0.0
    %883 = vmatpush1.msra.mxu0 0.0
    %884 = vmatprep.subr.mxu0 0.0
    %885 = vmatpush1.msra.mxu0 0.0
    %886 = vmatprep.subr.mxu0 0.0
    %887 = vmatpush1.msra.mxu0 0.0
    %888 = vmatprep.subr.mxu0 0.0
    %889 = vmatpush1.msra.mxu0 0.0
    %890 = vmatprep.subr.mxu0 0.0
    %891 = vmatpush1.msra.mxu0 0.0
    %892 = vmatprep.subr.mxu0 0.0
    %893 = vmatpush1.msra.mxu0 0.0
    %894 = vmatprep.subr.mxu0 0.0
    %895 = vmatpush1.msra.mxu0 0.0
    %896 = vmatprep.subr.mxu0 0.0
    %897 = vmatpush1.msra.mxu0 0.0
    %898 = vmatprep.subr.mxu0 0.0
    %899 = vmatpush1.msra.mxu0 0.0
    %900 = vmatprep.subr.mxu0 0.0
    %901 = vmatpush1.msra.mxu0 0.0
    %902 = vmatprep.subr.mxu0 0.0
    %903 = vmatpush1.msra.mxu0 0.0
    %904 = vmatprep.subr.mxu0 0.0
    %905 = vmatpush1.msra.mxu0 0.0
    %906 = vmatprep.subr.mxu0 0.0
    %907 = vmatpush1.msra.mxu0 0.0
    %908 = vmatprep.subr.mxu0 0.0
    %909 = vmatpush1.msra.mxu0 0.0
    %910 = vmatprep.subr.mxu0 0.0
    %911 = vmatpush1.msra.mxu0 0.0
    %912 = vmatprep.subr.mxu0 0.0
    %913 = vmatpush1.msra.mxu0 0.0
    %914 = vmatprep.subr.mxu0 0.0
    %915 = vmatpush1.msra.mxu0 0.0
    %916 = vmatprep.subr.mxu0 0.0
    %917 = vmatpush1.msra.mxu0 0.0
    %918 = vmatprep.subr.mxu0 0.0
    %919 = vmatpush1.msra.mxu0 0.0
    %920 = vmatprep.subr.mxu0 0.0
    %921 = vmatpush1.msra.mxu0 0.0
    %922 = vmatprep.subr.mxu0 0.0
    %923 = vmatpush1.msra.mxu0 0.0
    %924 = vmatprep.subr.mxu0 0.0
    %925 = vmatpush1.msra.mxu0 0.0
    %926 = vmatprep.subr.mxu0 0.0
    %927 = vmatpush1.msra.mxu0 0.0
    %928 = vmatprep.subr.mxu0 0.0
    %929 = vmatpush1.msra.mxu0 0.0
    %930 = vmatprep.subr.mxu0 0.0
    %931 = vmatpush1.msra.mxu0 0.0
    %932 = vmatprep.mubr.f32.mxu0 0.0
    %933 = vmatmul.mubr.f32.gmra.mrb[0].mxu0 %v845
    %v934 = vpop.f32.mrb[0].mxu0
    %v935 = vadd.f32 %v842, %v934
    %v936 = vpop.f32.mrb[0].mxu0
    %937 = vmatprep.mubr.f32.mxu0 0.0
    %938 = vmatmul.mubr.f32.gmra.mrb[0].mxu0 %v848
    %v939 = vpop.f32.mrb[0].mxu0
    %v940 = vadd.f32 %v842, %v939
    %v941 = vpop.f32.mrb[0].mxu0
    %942 = vmatprep.mubr.f32.mxu0 0.0
    %943 = vmatmul.mubr.f32.gmra.mrb[0].mxu0 %v851
    %v944 = vpop.f32.mrb[0].mxu0
    %v945 = vadd.f32 %v842, %v944
    %v946 = vpop.f32.mrb[0].mxu0
    %947 = vmatprep.mubr.f32.mxu0 0.0
    %948 = vmatmul.mubr.f32.gmra.mrb[0].mxu0 %v854
    %v949 = vpop.f32.mrb[0].mxu0
    %v950 = vadd.f32 %v842, %v949
    %v951 = vpop.f32.mrb[0].mxu0
    %952 = vmatprep.mubr.f32.mxu0 0.0
    %953 = vmatmul.mubr.f32.gmra.mrb[0].mxu0 %v857
    %v954 = vpop.f32.mrb[0].mxu0
    %v955 = vadd.f32 %v842, %v954
    %v956 = vpop.f32.mrb[0].mxu0
    %957 = vmatprep.mubr.f32.mxu0 0.0
    %958 = vmatmul.mubr.f32.gmra.mrb[0].mxu0 %v860
    %v959 = vpop.f32.mrb[0].mxu0
    %v960 = vadd.f32 %v842, %v959
    %v961 = vpop.f32.mrb[0].mxu0
    %962 = vmatprep.mubr.f32.mxu0 0.0
    %963 = vmatmul.mubr.f32.gmra.mrb[0].mxu0 %v863
    %v964 = vpop.f32.mrb[0].mxu0
    %v965 = vadd.f32 %v842, %v964
    %v966 = vpop.f32.mrb[0].mxu0
    %967 = vmatprep.mubr.f32.mxu0 0.0
    %968 = vmatmul.mubr.f32.gmra.mrb[0].mxu0 %v866
    %v969 = vpop.f32.mrb[0].mxu0
    %v970 = vadd.f32 %v842, %v969
    %v971 = vpop.f32.mrb[0].mxu0
    %972 = vdwg.mxu0
    %v974 = vcombine.high %v935, %v935
    %v976 = vunpack.c.l.s4 1966171168
    %v977 = vunpack.c.0.s8 %v976
    %v978 = vlaneseq
    %v979 = vshrl.u32 %v978, 7
    %v980 = vsub.s32 %v977, %v979
    %v981 = vrot.slane %v935, %v980
    %v983 = vunpack.c.l.s4 1966171168
    %v984 = vunpack.c.0.s8 %v983
    %v985 = vlaneseq
    %v986 = vshrl.u32 %v985, 7
    %v987 = vsub.s32 %v984, %v986
    %v988 = vrot.slane %v974, %v987
    %v989 = vcombine.high %v981, %v981
    %v990 = vcombine.high %v988, %v988
    %v992 = vunpack.c.l.s4 1966171168
    %v993 = vunpack.c.0.s8 %v992
    %v994 = vlaneseq
    %v995 = vshrl.u32 %v994, 7
    %v996 = vsub.s32 %v993, %v995
    %v997 = vrot.slane %v981, %v996
    %v999 = vunpack.c.l.s4 1966171168
    %v1000 = vunpack.c.0.s8 %v999
    %v1001 = vlaneseq
    %v1002 = vshrl.u32 %v1001, 7
    %v1003 = vsub.s32 %v1000, %v1002
    %v1004 = vrot.slane %v988, %v1003
    %v1006 = vunpack.c.l.s4 1966171168
    %v1007 = vunpack.c.0.s8 %v1006
    %v1008 = vlaneseq
    %v1009 = vshrl.u32 %v1008, 7
    %v1010 = vsub.s32 %v1007, %v1009
    %v1011 = vrot.slane %v989, %v1010
    %v1013 = vunpack.c.l.s4 1966171168
    %v1014 = vunpack.c.0.s8 %v1013
    %v1015 = vlaneseq
    %v1016 = vshrl.u32 %v1015, 7
    %v1017 = vsub.s32 %v1014, %v1016
    %v1018 = vrot.slane %v990, %v1017
    %v1019 = vcombine.high %v997, %v997
    %v1020 = vcombine.high %v1004, %v1004
    %v1021 = vcombine.high %v1011, %v1011
    %v1022 = vcombine.high %v1018, %v1018
    %vm1031 = vcmask 57344
    %1032 = vst.msk [vmem:[#allocation8] sm:$0x1] %vm1031, %v997
    %1033 = vst.msk [vmem:[#allocation8 + $0x8] sm:$0x1] %vm1031, %v1011
    %1034 = vst.msk [vmem:[#allocation8 + $0x10] sm:$0x1] %vm1031, %v1019
    %1035 = vst.msk [vmem:[#allocation8 + $0x18] sm:$0x1] %vm1031, %v1021
    %1036 = vst.msk [vmem:[#allocation8 + $0x20] sm:$0x1] %vm1031, %v1004
    %1037 = vst.msk [vmem:[#allocation8 + $0x28] sm:$0x1] %vm1031, %v1018
    %1038 = vst.msk [vmem:[#allocation8 + $0x30] sm:$0x1] %vm1031, %v1020
    %1039 = vst.msk [vmem:[#allocation8 + $0x38] sm:$0x1] %vm1031, %v1022
    %v1041 = vcombine.high %v940, %v940
    %v1043 = vunpack.c.l.s4 1966171168
    %v1044 = vunpack.c.0.s8 %v1043
    %v1045 = vlaneseq
    %v1046 = vshrl.u32 %v1045, 7
    %v1047 = vsub.s32 %v1044, %v1046
    %v1048 = vrot.slane %v940, %v1047
    %v1050 = vunpack.c.l.s4 1966171168
    %v1051 = vunpack.c.0.s8 %v1050
    %v1052 = vlaneseq
    %v1053 = vshrl.u32 %v1052, 7
    %v1054 = vsub.s32 %v1051, %v1053
    %v1055 = vrot.slane %v1041, %v1054
    %v1056 = vcombine.high %v1048, %v1048
    %v1057 = vcombine.high %v1055, %v1055
    %v1059 = vunpack.c.l.s4 1966171168
    %v1060 = vunpack.c.0.s8 %v1059
    %v1061 = vlaneseq
    %v1062 = vshrl.u32 %v1061, 7
    %v1063 = vsub.s32 %v1060, %v1062
    %v1064 = vrot.slane %v1048, %v1063
    %v1066 = vunpack.c.l.s4 1966171168
    %v1067 = vunpack.c.0.s8 %v1066
    %v1068 = vlaneseq
    %v1069 = vshrl.u32 %v1068, 7
    %v1070 = vsub.s32 %v1067, %v1069
    %v1071 = vrot.slane %v1055, %v1070
    %v1073 = vunpack.c.l.s4 1966171168
    %v1074 = vunpack.c.0.s8 %v1073
    %v1075 = vlaneseq
    %v1076 = vshrl.u32 %v1075, 7
    %v1077 = vsub.s32 %v1074, %v1076
    %v1078 = vrot.slane %v1056, %v1077
    %v1080 = vunpack.c.l.s4 1966171168
    %v1081 = vunpack.c.0.s8 %v1080
    %v1082 = vlaneseq
    %v1083 = vshrl.u32 %v1082, 7
    %v1084 = vsub.s32 %v1081, %v1083
    %v1085 = vrot.slane %v1057, %v1084
    %v1086 = vcombine.high %v1064, %v1064
    %v1087 = vcombine.high %v1071, %v1071
    %v1088 = vcombine.high %v1078, %v1078
    %v1089 = vcombine.high %v1085, %v1085
    %1098 = vst.msk [vmem:[#allocation8 + $0x1] sm:$0x1] %vm1031, %v1064
    %1099 = vst.msk [vmem:[#allocation8 + $0x9] sm:$0x1] %vm1031, %v1078
    %1100 = vst.msk [vmem:[#allocation8 + $0x11] sm:$0x1] %vm1031, %v1086
    %1101 = vst.msk [vmem:[#allocation8 + $0x19] sm:$0x1] %vm1031, %v1088
    %1102 = vst.msk [vmem:[#allocation8 + $0x21] sm:$0x1] %vm1031, %v1071
    %1103 = vst.msk [vmem:[#allocation8 + $0x29] sm:$0x1] %vm1031, %v1085
    %1104 = vst.msk [vmem:[#allocation8 + $0x31] sm:$0x1] %vm1031, %v1087
    %1105 = vst.msk [vmem:[#allocation8 + $0x39] sm:$0x1] %vm1031, %v1089
    %v1107 = vcombine.high %v945, %v945
    %v1109 = vunpack.c.l.s4 1966171168
    %v1110 = vunpack.c.0.s8 %v1109
    %v1111 = vlaneseq
    %v1112 = vshrl.u32 %v1111, 7
    %v1113 = vsub.s32 %v1110, %v1112
    %v1114 = vrot.slane %v945, %v1113
    %v1116 = vunpack.c.l.s4 1966171168
    %v1117 = vunpack.c.0.s8 %v1116
    %v1118 = vlaneseq
    %v1119 = vshrl.u32 %v1118, 7
    %v1120 = vsub.s32 %v1117, %v1119
    %v1121 = vrot.slane %v1107, %v1120
    %v1122 = vcombine.high %v1114, %v1114
    %v1123 = vcombine.high %v1121, %v1121
    %v1125 = vunpack.c.l.s4 1966171168
    %v1126 = vunpack.c.0.s8 %v1125
    %v1127 = vlaneseq
    %v1128 = vshrl.u32 %v1127, 7
    %v1129 = vsub.s32 %v1126, %v1128
    %v1130 = vrot.slane %v1114, %v1129
    %v1132 = vunpack.c.l.s4 1966171168
    %v1133 = vunpack.c.0.s8 %v1132
    %v1134 = vlaneseq
    %v1135 = vshrl.u32 %v1134, 7
    %v1136 = vsub.s32 %v1133, %v1135
    %v1137 = vrot.slane %v1121, %v1136
    %v1139 = vunpack.c.l.s4 1966171168
    %v1140 = vunpack.c.0.s8 %v1139
    %v1141 = vlaneseq
    %v1142 = vshrl.u32 %v1141, 7
    %v1143 = vsub.s32 %v1140, %v1142
    %v1144 = vrot.slane %v1122, %v1143
    %v1146 = vunpack.c.l.s4 1966171168
    %v1147 = vunpack.c.0.s8 %v1146
    %v1148 = vlaneseq
    %v1149 = vshrl.u32 %v1148, 7
    %v1150 = vsub.s32 %v1147, %v1149
    %v1151 = vrot.slane %v1123, %v1150
    %v1152 = vcombine.high %v1130, %v1130
    %v1153 = vcombine.high %v1137, %v1137
    %v1154 = vcombine.high %v1144, %v1144
    %v1155 = vcombine.high %v1151, %v1151
    %1164 = vst.msk [vmem:[#allocation8 + $0x2] sm:$0x1] %vm1031, %v1130
    %1165 = vst.msk [vmem:[#allocation8 + $0xa] sm:$0x1] %vm1031, %v1144
    %1166 = vst.msk [vmem:[#allocation8 + $0x12] sm:$0x1] %vm1031, %v1152
    %1167 = vst.msk [vmem:[#allocation8 + $0x1a] sm:$0x1] %vm1031, %v1154
    %1168 = vst.msk [vmem:[#allocation8 + $0x22] sm:$0x1] %vm1031, %v1137
    %1169 = vst.msk [vmem:[#allocation8 + $0x2a] sm:$0x1] %vm1031, %v1151
    %1170 = vst.msk [vmem:[#allocation8 + $0x32] sm:$0x1] %vm1031, %v1153
    %1171 = vst.msk [vmem:[#allocation8 + $0x3a] sm:$0x1] %vm1031, %v1155
    %v1173 = vcombine.high %v950, %v950
    %v1175 = vunpack.c.l.s4 1966171168
    %v1176 = vunpack.c.0.s8 %v1175
    %v1177 = vlaneseq
    %v1178 = vshrl.u32 %v1177, 7
    %v1179 = vsub.s32 %v1176, %v1178
    %v1180 = vrot.slane %v950, %v1179
    %v1182 = vunpack.c.l.s4 1966171168
    %v1183 = vunpack.c.0.s8 %v1182
    %v1184 = vlaneseq
    %v1185 = vshrl.u32 %v1184, 7
    %v1186 = vsub.s32 %v1183, %v1185
    %v1187 = vrot.slane %v1173, %v1186
    %v1188 = vcombine.high %v1180, %v1180
    %v1189 = vcombine.high %v1187, %v1187
    %v1191 = vunpack.c.l.s4 1966171168
    %v1192 = vunpack.c.0.s8 %v1191
    %v1193 = vlaneseq
    %v1194 = vshrl.u32 %v1193, 7
    %v1195 = vsub.s32 %v1192, %v1194
    %v1196 = vrot.slane %v1180, %v1195
    %v1198 = vunpack.c.l.s4 1966171168
    %v1199 = vunpack.c.0.s8 %v1198
    %v1200 = vlaneseq
    %v1201 = vshrl.u32 %v1200, 7
    %v1202 = vsub.s32 %v1199, %v1201
    %v1203 = vrot.slane %v1187, %v1202
    %v1205 = vunpack.c.l.s4 1966171168
    %v1206 = vunpack.c.0.s8 %v1205
    %v1207 = vlaneseq
    %v1208 = vshrl.u32 %v1207, 7
    %v1209 = vsub.s32 %v1206, %v1208
    %v1210 = vrot.slane %v1188, %v1209
    %v1212 = vunpack.c.l.s4 1966171168
    %v1213 = vunpack.c.0.s8 %v1212
    %v1214 = vlaneseq
    %v1215 = vshrl.u32 %v1214, 7
    %v1216 = vsub.s32 %v1213, %v1215
    %v1217 = vrot.slane %v1189, %v1216
    %v1218 = vcombine.high %v1196, %v1196
    %v1219 = vcombine.high %v1203, %v1203
    %v1220 = vcombine.high %v1210, %v1210
    %v1221 = vcombine.high %v1217, %v1217
    %1230 = vst.msk [vmem:[#allocation8 + $0x3] sm:$0x1] %vm1031, %v1196
    %1231 = vst.msk [vmem:[#allocation8 + $0xb] sm:$0x1] %vm1031, %v1210
    %1232 = vst.msk [vmem:[#allocation8 + $0x13] sm:$0x1] %vm1031, %v1218
    %1233 = vst.msk [vmem:[#allocation8 + $0x1b] sm:$0x1] %vm1031, %v1220
    %1234 = vst.msk [vmem:[#allocation8 + $0x23] sm:$0x1] %vm1031, %v1203
    %1235 = vst.msk [vmem:[#allocation8 + $0x2b] sm:$0x1] %vm1031, %v1217
    %1236 = vst.msk [vmem:[#allocation8 + $0x33] sm:$0x1] %vm1031, %v1219
    %1237 = vst.msk [vmem:[#allocation8 + $0x3b] sm:$0x1] %vm1031, %v1221
    %v1239 = vcombine.high %v955, %v955
    %v1241 = vunpack.c.l.s4 1966171168
    %v1242 = vunpack.c.0.s8 %v1241
    %v1243 = vlaneseq
    %v1244 = vshrl.u32 %v1243, 7
    %v1245 = vsub.s32 %v1242, %v1244
    %v1246 = vrot.slane %v955, %v1245
    %v1248 = vunpack.c.l.s4 1966171168
    %v1249 = vunpack.c.0.s8 %v1248
    %v1250 = vlaneseq
    %v1251 = vshrl.u32 %v1250, 7
    %v1252 = vsub.s32 %v1249, %v1251
    %v1253 = vrot.slane %v1239, %v1252
    %v1254 = vcombine.high %v1246, %v1246
    %v1255 = vcombine.high %v1253, %v1253
    %v1257 = vunpack.c.l.s4 1966171168
    %v1258 = vunpack.c.0.s8 %v1257
    %v1259 = vlaneseq
    %v1260 = vshrl.u32 %v1259, 7
    %v1261 = vsub.s32 %v1258, %v1260
    %v1262 = vrot.slane %v1246, %v1261
    %v1264 = vunpack.c.l.s4 1966171168
    %v1265 = vunpack.c.0.s8 %v1264
    %v1266 = vlaneseq
    %v1267 = vshrl.u32 %v1266, 7
    %v1268 = vsub.s32 %v1265, %v1267
    %v1269 = vrot.slane %v1253, %v1268
    %v1271 = vunpack.c.l.s4 1966171168
    %v1272 = vunpack.c.0.s8 %v1271
    %v1273 = vlaneseq
    %v1274 = vshrl.u32 %v1273, 7
    %v1275 = vsub.s32 %v1272, %v1274
    %v1276 = vrot.slane %v1254, %v1275
    %v1278 = vunpack.c.l.s4 1966171168
    %v1279 = vunpack.c.0.s8 %v1278
    %v1280 = vlaneseq
    %v1281 = vshrl.u32 %v1280, 7
    %v1282 = vsub.s32 %v1279, %v1281
    %v1283 = vrot.slane %v1255, %v1282
    %v1284 = vcombine.high %v1262, %v1262
    %v1285 = vcombine.high %v1269, %v1269
    %v1286 = vcombine.high %v1276, %v1276
    %v1287 = vcombine.high %v1283, %v1283
    %1296 = vst.msk [vmem:[#allocation8 + $0x4] sm:$0x1] %vm1031, %v1262
    %1297 = vst.msk [vmem:[#allocation8 + $0xc] sm:$0x1] %vm1031, %v1276
    %1298 = vst.msk [vmem:[#allocation8 + $0x14] sm:$0x1] %vm1031, %v1284
    %1299 = vst.msk [vmem:[#allocation8 + $0x1c] sm:$0x1] %vm1031, %v1286
    %1300 = vst.msk [vmem:[#allocation8 + $0x24] sm:$0x1] %vm1031, %v1269
    %1301 = vst.msk [vmem:[#allocation8 + $0x2c] sm:$0x1] %vm1031, %v1283
    %1302 = vst.msk [vmem:[#allocation8 + $0x34] sm:$0x1] %vm1031, %v1285
    %1303 = vst.msk [vmem:[#allocation8 + $0x3c] sm:$0x1] %vm1031, %v1287
    %v1305 = vcombine.high %v960, %v960
    %v1307 = vunpack.c.l.s4 1966171168
    %v1308 = vunpack.c.0.s8 %v1307
    %v1309 = vlaneseq
    %v1310 = vshrl.u32 %v1309, 7
    %v1311 = vsub.s32 %v1308, %v1310
    %v1312 = vrot.slane %v960, %v1311
    %v1314 = vunpack.c.l.s4 1966171168
    %v1315 = vunpack.c.0.s8 %v1314
    %v1316 = vlaneseq
    %v1317 = vshrl.u32 %v1316, 7
    %v1318 = vsub.s32 %v1315, %v1317
    %v1319 = vrot.slane %v1305, %v1318
    %v1320 = vcombine.high %v1312, %v1312
    %v1321 = vcombine.high %v1319, %v1319
    %v1323 = vunpack.c.l.s4 1966171168
    %v1324 = vunpack.c.0.s8 %v1323
    %v1325 = vlaneseq
    %v1326 = vshrl.u32 %v1325, 7
    %v1327 = vsub.s32 %v1324, %v1326
    %v1328 = vrot.slane %v1312, %v1327
    %v1330 = vunpack.c.l.s4 1966171168
    %v1331 = vunpack.c.0.s8 %v1330
    %v1332 = vlaneseq
    %v1333 = vshrl.u32 %v1332, 7
    %v1334 = vsub.s32 %v1331, %v1333
    %v1335 = vrot.slane %v1319, %v1334
    %v1337 = vunpack.c.l.s4 1966171168
    %v1338 = vunpack.c.0.s8 %v1337
    %v1339 = vlaneseq
    %v1340 = vshrl.u32 %v1339, 7
    %v1341 = vsub.s32 %v1338, %v1340
    %v1342 = vrot.slane %v1320, %v1341
    %v1344 = vunpack.c.l.s4 1966171168
    %v1345 = vunpack.c.0.s8 %v1344
    %v1346 = vlaneseq
    %v1347 = vshrl.u32 %v1346, 7
    %v1348 = vsub.s32 %v1345, %v1347
    %v1349 = vrot.slane %v1321, %v1348
    %v1350 = vcombine.high %v1328, %v1328
    %v1351 = vcombine.high %v1335, %v1335
    %v1352 = vcombine.high %v1342, %v1342
    %v1353 = vcombine.high %v1349, %v1349
    %1362 = vst.msk [vmem:[#allocation8 + $0x5] sm:$0x1] %vm1031, %v1328
    %1363 = vst.msk [vmem:[#allocation8 + $0xd] sm:$0x1] %vm1031, %v1342
    %1364 = vst.msk [vmem:[#allocation8 + $0x15] sm:$0x1] %vm1031, %v1350
    %1365 = vst.msk [vmem:[#allocation8 + $0x1d] sm:$0x1] %vm1031, %v1352
    %1366 = vst.msk [vmem:[#allocation8 + $0x25] sm:$0x1] %vm1031, %v1335
    %1367 = vst.msk [vmem:[#allocation8 + $0x2d] sm:$0x1] %vm1031, %v1349
    %1368 = vst.msk [vmem:[#allocation8 + $0x35] sm:$0x1] %vm1031, %v1351
    %1369 = vst.msk [vmem:[#allocation8 + $0x3d] sm:$0x1] %vm1031, %v1353
    %v1371 = vcombine.high %v965, %v965
    %v1373 = vunpack.c.l.s4 1966171168
    %v1374 = vunpack.c.0.s8 %v1373
    %v1375 = vlaneseq
    %v1376 = vshrl.u32 %v1375, 7
    %v1377 = vsub.s32 %v1374, %v1376
    %v1378 = vrot.slane %v965, %v1377
    %v1380 = vunpack.c.l.s4 1966171168
    %v1381 = vunpack.c.0.s8 %v1380
    %v1382 = vlaneseq
    %v1383 = vshrl.u32 %v1382, 7
    %v1384 = vsub.s32 %v1381, %v1383
    %v1385 = vrot.slane %v1371, %v1384
    %v1386 = vcombine.high %v1378, %v1378
    %v1387 = vcombine.high %v1385, %v1385
    %v1389 = vunpack.c.l.s4 1966171168
    %v1390 = vunpack.c.0.s8 %v1389
    %v1391 = vlaneseq
    %v1392 = vshrl.u32 %v1391, 7
    %v1393 = vsub.s32 %v1390, %v1392
    %v1394 = vrot.slane %v1378, %v1393
    %v1396 = vunpack.c.l.s4 1966171168
    %v1397 = vunpack.c.0.s8 %v1396
    %v1398 = vlaneseq
    %v1399 = vshrl.u32 %v1398, 7
    %v1400 = vsub.s32 %v1397, %v1399
    %v1401 = vrot.slane %v1385, %v1400
    %v1403 = vunpack.c.l.s4 1966171168
    %v1404 = vunpack.c.0.s8 %v1403
    %v1405 = vlaneseq
    %v1406 = vshrl.u32 %v1405, 7
    %v1407 = vsub.s32 %v1404, %v1406
    %v1408 = vrot.slane %v1386, %v1407
    %v1410 = vunpack.c.l.s4 1966171168
    %v1411 = vunpack.c.0.s8 %v1410
    %v1412 = vlaneseq
    %v1413 = vshrl.u32 %v1412, 7
    %v1414 = vsub.s32 %v1411, %v1413
    %v1415 = vrot.slane %v1387, %v1414
    %v1416 = vcombine.high %v1394, %v1394
    %v1417 = vcombine.high %v1401, %v1401
    %v1418 = vcombine.high %v1408, %v1408
    %v1419 = vcombine.high %v1415, %v1415
    %1428 = vst.msk [vmem:[#allocation8 + $0x6] sm:$0x1] %vm1031, %v1394
    %1429 = vst.msk [vmem:[#allocation8 + $0xe] sm:$0x1] %vm1031, %v1408
    %1430 = vst.msk [vmem:[#allocation8 + $0x16] sm:$0x1] %vm1031, %v1416
    %1431 = vst.msk [vmem:[#allocation8 + $0x1e] sm:$0x1] %vm1031, %v1418
    %1432 = vst.msk [vmem:[#allocation8 + $0x26] sm:$0x1] %vm1031, %v1401
    %1433 = vst.msk [vmem:[#allocation8 + $0x2e] sm:$0x1] %vm1031, %v1415
    %1434 = vst.msk [vmem:[#allocation8 + $0x36] sm:$0x1] %vm1031, %v1417
    %1435 = vst.msk [vmem:[#allocation8 + $0x3e] sm:$0x1] %vm1031, %v1419
    %v1437 = vcombine.high %v970, %v970
    %v1439 = vunpack.c.l.s4 1966171168
    %v1440 = vunpack.c.0.s8 %v1439
    %v1441 = vlaneseq
    %v1442 = vshrl.u32 %v1441, 7
    %v1443 = vsub.s32 %v1440, %v1442
    %v1444 = vrot.slane %v970, %v1443
    %v1446 = vunpack.c.l.s4 1966171168
    %v1447 = vunpack.c.0.s8 %v1446
    %v1448 = vlaneseq
    %v1449 = vshrl.u32 %v1448, 7
    %v1450 = vsub.s32 %v1447, %v1449
    %v1451 = vrot.slane %v1437, %v1450
    %v1452 = vcombine.high %v1444, %v1444
    %v1453 = vcombine.high %v1451, %v1451
    %v1455 = vunpack.c.l.s4 1966171168
    %v1456 = vunpack.c.0.s8 %v1455
    %v1457 = vlaneseq
    %v1458 = vshrl.u32 %v1457, 7
    %v1459 = vsub.s32 %v1456, %v1458
    %v1460 = vrot.slane %v1444, %v1459
    %v1462 = vunpack.c.l.s4 1966171168
    %v1463 = vunpack.c.0.s8 %v1462
    %v1464 = vlaneseq
    %v1465 = vshrl.u32 %v1464, 7
    %v1466 = vsub.s32 %v1463, %v1465
    %v1467 = vrot.slane %v1451, %v1466
    %v1469 = vunpack.c.l.s4 1966171168
    %v1470 = vunpack.c.0.s8 %v1469
    %v1471 = vlaneseq
    %v1472 = vshrl.u32 %v1471, 7
    %v1473 = vsub.s32 %v1470, %v1472
    %v1474 = vrot.slane %v1452, %v1473
    %v1476 = vunpack.c.l.s4 1966171168
    %v1477 = vunpack.c.0.s8 %v1476
    %v1478 = vlaneseq
    %v1479 = vshrl.u32 %v1478, 7
    %v1480 = vsub.s32 %v1477, %v1479
    %v1481 = vrot.slane %v1453, %v1480
    %v1482 = vcombine.high %v1460, %v1460
    %v1483 = vcombine.high %v1467, %v1467
    %v1484 = vcombine.high %v1474, %v1474
    %v1485 = vcombine.high %v1481, %v1481
    %1494 = vst.msk [vmem:[#allocation8 + $0x7] sm:$0x1] %vm1031, %v1460
    %1495 = vst.msk [vmem:[#allocation8 + $0xf] sm:$0x1] %vm1031, %v1474
    %1496 = vst.msk [vmem:[#allocation8 + $0x17] sm:$0x1] %vm1031, %v1482
    %1497 = vst.msk [vmem:[#allocation8 + $0x1f] sm:$0x1] %vm1031, %v1484
    %1498 = vst.msk [vmem:[#allocation8 + $0x27] sm:$0x1] %vm1031, %v1467
    %1499 = vst.msk [vmem:[#allocation8 + $0x2f] sm:$0x1] %vm1031, %v1481
    %1500 = vst.msk [vmem:[#allocation8 + $0x37] sm:$0x1] %vm1031, %v1483
    %1501 = vst.msk [vmem:[#allocation8 + $0x3f] sm:$0x1] %vm1031, %v1485
    // Predicated region
    $region38: #{ex_rnn_forward.1} parent=1 // pred_check
      _
    $region39: #{ex_rnn_forward.1} parent=1 // pred_check_branch
      %1503 = sbr.rel (0) target = $region41
    $region40: #{ex_rnn_forward.1} parent=1 // pred_region
      %s1505 = ssub.s32 1024, 1024
      %1506 = vsyncadd [#allocation5], %s1505
      %s1507 = sshll.u32 [#allocation8], 4
      %s1508 = int_to_ptr.vmem [resolvable:$true] %s1507
      %1513 = dma.vmem_to_hbm [thread:$0]  %s1508, 1024, %s7, [#allocation5], 128, 128, 8
    $region41: #{ex_rnn_forward.1} parent=1 // pred_fallthru
      _
    // Predicated region
    $region42: #{ex_rnn_forward.1} parent=1 // pred_check
      _
    $region43: #{ex_rnn_forward.1} parent=1 // pred_check_branch
      %1515 = sbr.rel (0) target = $region45
    $region44: #{ex_rnn_forward.1} parent=1 // pred_region
      %s1517 = ssub.s32 128, 128
      %1518 = vsyncadd [#allocation10], %s1517
      %s1520 = sshll.u32 [#allocation9], 4
      %s1521 = int_to_ptr.vmem [resolvable:$true] %s1520
      %1523 = dma.vmem_to_hbm [thread:$0]  %s1521, 128, %s8, [#allocation10]
    $region45: #{ex_rnn_forward.1} parent=1 // pred_fallthru
      _
    // Predicated region
    $region46: #{ex_rnn_forward.1} parent=1 // pred_check
      _
    $region47: #{ex_rnn_forward.1} parent=1 // pred_check_branch
      %1525 = sbr.rel (0) target = $region49
    $region48: #{ex_rnn_forward.1} parent=1 // pred_region
      %1526 = dma.done [#allocation5], 1024
    $region49: #{ex_rnn_forward.1} parent=1 // pred_fallthru
      _
    // Predicated region
    $region50: #{ex_rnn_forward.1} parent=1 // pred_check
      _
    $region51: #{ex_rnn_forward.1} parent=1 // pred_check_branch
      %1528 = sbr.rel (0) target = $region53
    $region52: #{ex_rnn_forward.1} parent=1 // pred_region
      %1529 = dma.done [#allocation10], 128
    $region53: #{ex_rnn_forward.1} parent=1 // pred_fallthru
      _
    %1530 = vsyncpa [#allocation4], 1
    %1531 = vsyncpa [#allocation7], 1
    %1532 = vsyncpa [#allocation5], 1
    %1533 = vsyncpa [#allocation10], 1

</llo_original>
